<compile_context>
chip_gen: v5e
topology: v5e:2x2
jax: 0.10.0
libtpu: 0.0.40
codegen_flags: <defaults>
</compile_context>

<pallas_src>
import functools
import math

import jax
import jax.numpy as jnp
import numpy as np
from jax import lax
from jax.experimental import pallas as pl
from jax.experimental.pallas import tpu as pltpu

LN_EPS = 1e-5          # nn.LayerNorm default
_MASK_FILL = -1e30     # finite f32 fill for masked scores


def _layernorm(h, gamma, beta):
    mu = jnp.mean(h, axis=-1, keepdims=True)
    var = jnp.mean((h - mu) ** 2, axis=-1, keepdims=True)
    return (h - mu) * lax.rsqrt(var + LN_EPS) * gamma + beta


def encoder_block_kernel(
    xq_ref, xkv_ref, mask_ref,
    wq_ref, bq_ref, wkv_ref, bkv_ref, wo_ref, bo_ref,
    g1_ref, be1_ref, w1_ref, b1_ref, w2_ref, b2_ref, g2_ref, be2_ref,
    o_ref,
    k_sc, v_sc,
    *, n_heads, kv_tile,
):
    f32, bf16 = jnp.float32, jnp.bfloat16
    x_q = xq_ref[...].astype(f32)                 # (TQ, E)  query rows / residual
    tq, e = x_q.shape
    nh = n_heads
    dh = e // nh
    s_len = xkv_ref.shape[0]
    n_kv = s_len // kv_tile

    # ---- K/V projection: once per batch element, cached in VMEM scratch ----
    @pl.when(pl.program_id(1) == 0)
    def _():
        kv = jnp.dot(xkv_ref[...], wkv_ref[...], preferred_element_type=f32)
        kv = (kv + bkv_ref[...]).astype(bf16)     # (S, 2E) = [K | V]
        for h in range(nh):
            k_sc[h] = kv[:, h * dh:(h + 1) * dh]
            v_sc[h] = kv[:, e + h * dh:e + (h + 1) * dh]

    # ---- full-width Q projection (1/sqrt(d) folded into wq / bq on host) ----
    q = jnp.dot(x_q.astype(bf16), wq_ref[...], preferred_element_type=f32)
    q = (q + bq_ref[...]).astype(bf16)            # (TQ, E)
    q_h = jnp.stack([q[:, h * dh:(h + 1) * dh] for h in range(nh)], axis=0)  # (nh,TQ,d)

    # ---- flash-style online softmax over KV tiles ----
    def kv_step(t, carry):
        m, l, acc = carry
        off = t * kv_tile
        if not isinstance(off, int):
            off = pl.multiple_of(off, kv_tile)
        k_t = k_sc[:, pl.ds(off, kv_tile), :]     # (nh, TK, d) bf16
        v_t = v_sc[:, pl.ds(off, kv_tile), :]     # (nh, TK, d) bf16
        msk = mask_ref[:, pl.ds(off, kv_tile)]    # (TQ, TK) int8
        s = jnp.einsum("hqd,hkd->hqk", q_h, k_t, preferred_element_type=f32)
        s = jnp.where(msk[None, :, :] != 0, s, f32(_MASK_FILL))
        m_new = jnp.maximum(m, jnp.max(s, axis=-1, keepdims=True))
        alpha = jnp.exp(m - m_new)
        p = jnp.exp(s - m_new)
        l_new = alpha * l + jnp.sum(p, axis=-1, keepdims=True)
        acc_new = alpha * acc + jnp.einsum(
            "hqk,hkd->hqd", p.astype(bf16), v_t, preferred_element_type=f32)
        return m_new, l_new, acc_new

    carry = (jnp.full((nh, tq, 1), -jnp.inf, f32),
             jnp.zeros((nh, tq, 1), f32),
             jnp.zeros((nh, tq, dh), f32))
    if n_kv <= 32:                                 # static offsets, unrolled
        for t in range(n_kv):
            carry = kv_step(t, carry)
    else:
        carry = lax.fori_loop(0, n_kv, kv_step, carry)
    _, l, acc = carry
    # l >= 1 by construction (finite mask fill), but guard anyway.
    ctx = acc * pl.reciprocal(jnp.maximum(l, f32(1e-30)), approx=True)  # (nh,TQ,d)

    # ---- output projection: per-head accumulate (folds the head reduction) ----
    attn = jnp.zeros((tq, e), f32)
    for h in range(nh):
        attn = attn + jnp.dot(ctx[h].astype(bf16), wo_ref[h],
                              preferred_element_type=f32)
    attn = attn + bo_ref[...]

    # TODO(synk): nn.Dropout(p=0.1) is identity in eval mode; not applied here.

    # ---- residual + LayerNorm 1 ----
    h1 = _layernorm(x_q + attn, g1_ref[...], be1_ref[...])

    # ---- feed-forward: Linear -> ReLU -> Linear (bf16 MXU, f32 accumulate) ----
    ff = jnp.dot(h1.astype(bf16), w1_ref[...], preferred_element_type=f32) + b1_ref[...]
    ff = jnp.maximum(ff, 0.0)
    ff = jnp.dot(ff.astype(bf16), w2_ref[...], preferred_element_type=f32) + b2_ref[...]

    # ---- residual + LayerNorm 2 ----
    out = _layernorm(h1 + ff, g2_ref[...], be2_ref[...])
    o_ref[...] = out.astype(o_ref.dtype)


# ---------------------------- host-side helpers ----------------------------
def _vmem_budget_bytes():
    # ~100 MiB on v5e/v6e (128 MiB physical VMEM), ~51 MiB on v7x (64 MiB).
    try:
        cap = int(pltpu.get_tpu_info().vmem_capacity_bytes)
    except Exception:
        cap = 64 * 2**20
    return int(min(cap * 0.8, 100 * 2**20))


def _pick_kv_tile(seq_len):
    for t in (512, 256, 128, 64, 32, 16, 8):
        if seq_len % t == 0:
            return t
    return seq_len


def _vmem_footprint(tq, seq_len, e, h_dim, nh, kv_tile, weight_bytes):
    dh = e // nh
    # double-buffered streamed blocks: xq f32, xkv bf16, mask int8, out f32
    streamed = 2 * (tq * e * 4 + seq_len * e * 2 + tq * seq_len + tq * e * 4)
    scratch = 2 * nh * seq_len * dh * 2                 # K/V caches (bf16)
    inter = (
        tq * e * 6 * 4                                  # q/attn/h1/ff-out/residual temps
        + nh * tq * dh * (4 + 2 + 4)                    # q_h, ctx, acc
        + 3 * nh * tq * kv_tile * 4                     # scores / probs copies
        + nh * tq * 2 * 4                               # m, l
        + tq * h_dim * (4 + 2)                          # FFN hidden f32 + bf16
    )
    return streamed + 2 * weight_bytes + scratch + 2 * inter


def _pick_q_tile(seq_len, e, h_dim, nh, kv_tile, weight_bytes, budget, q_tile=None):
    if q_tile is not None:
        return q_tile
    cands = [t for t in (512, 256, 128, 64, 32, 16, 8) if seq_len % t == 0]
    if not cands:
        cands = [seq_len]
    for t in cands:
        if _vmem_footprint(t, seq_len, e, h_dim, nh, kv_tile, weight_bytes) <= 0.7 * budget:
            return t
    return cands[-1]


def encoder_block(x, mask, params, *, n_heads, q_tile=None):
    B, S, E = x.shape
    H = params["w1"].shape[1]
    assert E % n_heads == 0
    d = E // n_heads
    scale = 1.0 / math.sqrt(d)
    f32, bf16 = jnp.float32, jnp.bfloat16

    # Matrices stored bf16 (MXU-native, half the HBM DMA / VMEM footprint);
    # biases / LN params stay f32.  1/sqrt(d) folded into Wq and bq.
    weights = [
        (params["wq"] * scale).astype(bf16),                                 # (E, E)
        (params["bq"] * scale).astype(f32),                                  # (1, E)
        jnp.concatenate([params["wk"], params["wv"]], axis=1).astype(bf16),  # (E, 2E)
        jnp.concatenate([params["bk"], params["bv"]], axis=1).astype(f32),   # (1, 2E)
        params["wo"].reshape(n_heads, d, E).astype(bf16),                    # (nh, d, E)
        params["bo"].astype(f32),
        params["g1"].astype(f32), params["be1"].astype(f32),
        params["w1"].astype(bf16), params["b1"].astype(f32),
        params["w2"].astype(bf16), params["b2"].astype(f32),
        params["g2"].astype(f32), params["be2"].astype(f32),
    ]
    weight_bytes = sum(a.size * a.dtype.itemsize for a in weights)

    kv_tile = _pick_kv_tile(S)
    budget = _vmem_budget_bytes()
    tq = _pick_q_tile(S, E, H, n_heads, kv_tile, weight_bytes, budget, q_tile)
    n_q = pl.cdiv(S, tq)

    def const_spec(a):
        return pl.BlockSpec(a.shape, lambda b, i, _n=a.ndim: (0,) * _n)

    weight_specs = [const_spec(a) for a in weights]
    mask_i8 = mask.astype(jnp.int8)      # 4x less mask DMA than f32
    x_kv_bf16 = x.astype(bf16)           # K/V source is only ever a bf16 MXU operand

    vmem_limit = int(min(max(_vmem_footprint(tq, S, E, H, n_heads, kv_tile,
                                             weight_bytes), 32 * 2**20), budget))

    kernel = functools.partial(encoder_block_kernel, n_heads=n_heads, kv_tile=kv_tile)

    return pl.pallas_call(
        kernel,
        out_shape=jax.ShapeDtypeStruct((B, S, E), jnp.float32),
        grid_spec=pltpu.PrefetchScalarGridSpec(
            num_scalar_prefetch=0,
            grid=(B, n_q),
            in_specs=[
                pl.BlockSpec((None, tq, E), lambda b, i: (b, i, 0)),  # query rows (f32)
                pl.BlockSpec((None, S, E), lambda b, i: (b, 0, 0)),   # full seq (bf16), once per b
                pl.BlockSpec((None, tq, S), lambda b, i: (b, i, 0)),  # int8 mask rows
            ] + weight_specs,
            out_specs=pl.BlockSpec((None, tq, E), lambda b, i: (b, i, 0)),
            scratch_shapes=[
                pltpu.VMEM((n_heads, S, d), bf16),   # K cache (per batch element)
                pltpu.VMEM((n_heads, S, d), bf16),   # V cache (per batch element)
            ],
        ),
        compiler_params=pltpu.CompilerParams(
            dimension_semantics=("parallel", "arbitrary"),
            vmem_limit_bytes=vmem_limit,
        ),
    )(x, x_kv_bf16, mask_i8, *weights)


# --------------------------- pure-JAX reference ---------------------------
def encoder_block_ref(x, mask, p, n_heads):
    B, S, E = x.shape
    d = E // n_heads
    q = x @ p["wq"] + p["bq"]
    k = x @ p["wk"] + p["bk"]
    v = x @ p["wv"] + p["bv"]
    qh = q.reshape(B, S, n_heads, d).transpose(0, 2, 1, 3)
    kh = k.reshape(B, S, n_heads, d).transpose(0, 2, 1, 3)
    vh = v.reshape(B, S, n_heads, d).transpose(0, 2, 1, 3)
    s = jnp.einsum("bhqd,bhkd->bhqk", qh, kh) / math.sqrt(d)
    s = jnp.where(mask[:, None, :, :] > 0, s, -1e9)
    p_attn = jax.nn.softmax(s, axis=-1)
    ctx = jnp.einsum("bhqk,bhkd->bhqd", p_attn, vh)
    ctx = ctx.transpose(0, 2, 1, 3).reshape(B, S, E)
    attn_out = ctx @ p["wo"] + p["bo"]
    h1 = _layernorm(x + attn_out, p["g1"], p["be1"])
    ff = jnp.maximum(h1 @ p["w1"] + p["b1"], 0.0) @ p["w2"] + p["b2"]
    return _layernorm(h1 + ff, p["g2"], p["be2"])


def init_params(key, embed_dim, hidden_dim):
    ks = jax.random.split(key, 8)
    s_e = 1.0 / math.sqrt(embed_dim)
    s_h = 1.0 / math.sqrt(hidden_dim)
    return {
        "wq": jax.random.normal(ks[0], (embed_dim, embed_dim), jnp.float32) * s_e,
        "wk": jax.random.normal(ks[1], (embed_dim, embed_dim), jnp.float32) * s_e,
        "wv": jax.random.normal(ks[2], (embed_dim, embed_dim), jnp.float32) * s_e,
        "wo": jax.random.normal(ks[3], (embed_dim, embed_dim), jnp.float32) * s_e,
        "w1": jax.random.normal(ks[4], (embed_dim, hidden_dim), jnp.float32) * s_e,
        "w2": jax.random.normal(ks[5], (hidden_dim, embed_dim), jnp.float32) * s_h,
        "bq": jax.random.normal(ks[6], (1, embed_dim), jnp.float32) * 0.02,
        "bk": jnp.zeros((1, embed_dim), jnp.float32),
        "bv": jax.random.normal(ks[7], (1, embed_dim), jnp.float32) * 0.02,
        "bo": jnp.zeros((1, embed_dim), jnp.float32),
        "b1": jnp.zeros((1, hidden_dim), jnp.float32),
        "b2": jnp.zeros((1, embed_dim), jnp.float32),
        "g1": jnp.ones((1, embed_dim), jnp.float32),
        "be1": jnp.zeros((1, embed_dim), jnp.float32),
        "g2": jnp.ones((1, embed_dim), jnp.float32),
        "be2": jnp.zeros((1, embed_dim), jnp.float32),
    }


if __name__ == "__main__":
    B, S, E, H, NH = 2, 8, 32, 64, 8  # batch, seq, embed_dim, hidden_dim, n_heads

    key = jax.random.PRNGKey(0)
    kx, kp = jax.random.split(key)
    x = jax.random.normal(kx, (B, S, E), jnp.float32)
    # causal-style mask (1 = attend, 0 = masked), broadcast over batch
    mask = jnp.broadcast_to(jnp.tril(jnp.ones((S, S), jnp.float32)), (B, S, S))
    params = init_params(kp, E, H)

    out = jax.block_until_ready(encoder_block(x, mask, params, n_heads=NH))

    ref = encoder_block_ref(x, mask, params, NH)
    # Tolerance reflects bf16 MXU operands / bf16 weights in the kernel vs the
    # pure-f32 reference; structural errors would be O(1).
    np.testing.assert_allclose(np.asarray(out), np.asarray(ref),
                               rtol=5e-2, atol=5e-2)
    print("KERNEL_OK")
</pallas_src>

<mosaic_0001>
module attributes {stable_mosaic.version = 11 : i64} {
  func.func @encoder_block_kernel(%arg0: i32, %arg1: i32, %arg2: memref<1x8x32xf32, #tpu.memory_space<vmem>>, %arg3: memref<1x8x32xbf16, #tpu.memory_space<vmem>>, %arg4: memref<1x8x8xi8, #tpu.memory_space<vmem>>, %arg5: memref<32x32xbf16, #tpu.memory_space<vmem>>, %arg6: memref<1x32xf32, #tpu.memory_space<vmem>>, %arg7: memref<32x64xbf16, #tpu.memory_space<vmem>>, %arg8: memref<1x64xf32, #tpu.memory_space<vmem>>, %arg9: memref<8x4x32xbf16, #tpu.memory_space<vmem>>, %arg10: memref<1x32xf32, #tpu.memory_space<vmem>>, %arg11: memref<1x32xf32, #tpu.memory_space<vmem>>, %arg12: memref<1x32xf32, #tpu.memory_space<vmem>>, %arg13: memref<32x64xbf16, #tpu.memory_space<vmem>>, %arg14: memref<1x64xf32, #tpu.memory_space<vmem>>, %arg15: memref<64x32xbf16, #tpu.memory_space<vmem>>, %arg16: memref<1x32xf32, #tpu.memory_space<vmem>>, %arg17: memref<1x32xf32, #tpu.memory_space<vmem>>, %arg18: memref<1x32xf32, #tpu.memory_space<vmem>>, %arg19: memref<1x8x32xf32, #tpu.memory_space<vmem>>, %arg20: memref<8x8x4xbf16, #tpu.memory_space<vmem>>, %arg21: memref<8x8x4xbf16, #tpu.memory_space<vmem>>) attributes {dimension_semantics = [#tpu.dimension_semantics<parallel>, #tpu.dimension_semantics<arbitrary>], iteration_bounds = array<i64: 2, 1>, scalar_prefetch = 0 : i64, scratch_operands = 2 : i64, tpu.core_type = #tpu.core_type<tc>, window_params = [{transform_indices = @transform_0, window_bounds = array<i64: 1, 8, 32>}, {transform_indices = @transform_1, window_bounds = array<i64: 1, 8, 32>}, {transform_indices = @transform_2, window_bounds = array<i64: 1, 8, 8>}, {pipeline_mode = #tpu.pipeline_mode<synchronous>, transform_indices = @transform_3, window_bounds = array<i64: 32, 32>}, {pipeline_mode = #tpu.pipeline_mode<synchronous>, transform_indices = @transform_4, window_bounds = array<i64: 1, 32>}, {pipeline_mode = #tpu.pipeline_mode<synchronous>, transform_indices = @transform_5, window_bounds = array<i64: 32, 64>}, {pipeline_mode = #tpu.pipeline_mode<synchronous>, transform_indices = @transform_6, window_bounds = array<i64: 1, 64>}, {pipeline_mode = #tpu.pipeline_mode<synchronous>, transform_indices = @transform_7, window_bounds = array<i64: 8, 4, 32>}, {pipeline_mode = #tpu.pipeline_mode<synchronous>, transform_indices = @transform_8, window_bounds = array<i64: 1, 32>}, {pipeline_mode = #tpu.pipeline_mode<synchronous>, transform_indices = @transform_9, window_bounds = array<i64: 1, 32>}, {pipeline_mode = #tpu.pipeline_mode<synchronous>, transform_indices = @transform_10, window_bounds = array<i64: 1, 32>}, {pipeline_mode = #tpu.pipeline_mode<synchronous>, transform_indices = @transform_11, window_bounds = array<i64: 32, 64>}, {pipeline_mode = #tpu.pipeline_mode<synchronous>, transform_indices = @transform_12, window_bounds = array<i64: 1, 64>}, {pipeline_mode = #tpu.pipeline_mode<synchronous>, transform_indices = @transform_13, window_bounds = array<i64: 64, 32>}, {pipeline_mode = #tpu.pipeline_mode<synchronous>, transform_indices = @transform_14, window_bounds = array<i64: 1, 32>}, {pipeline_mode = #tpu.pipeline_mode<synchronous>, transform_indices = @transform_15, window_bounds = array<i64: 1, 32>}, {pipeline_mode = #tpu.pipeline_mode<synchronous>, transform_indices = @transform_16, window_bounds = array<i64: 1, 32>}, {transform_indices = @transform_17, window_bounds = array<i64: 1, 8, 32>}]} {
    %c0 = arith.constant 0 : index
    %c0_0 = arith.constant 0 : index
    %c0_1 = arith.constant 0 : index
    %0 = vector.load %arg2[%c0, %c0_0, %c0_1] : memref<1x8x32xf32, #tpu.memory_space<vmem>>, vector<1x8x32xf32>
    %1 = vector.shape_cast %0 : vector<1x8x32xf32> to vector<8x32xf32>
    %c0_i32 = arith.constant 0 : i32
    %2 = arith.cmpi eq, %arg1, %c0_i32 : i32
    %3 = arith.extui %2 : i1 to i32
    %c0_i32_2 = arith.constant 0 : i32
    %4 = arith.cmpi ne, %3, %c0_i32_2 : i32
    scf.if %4 {
      %c0_85 = arith.constant 0 : index
      %c0_86 = arith.constant 0 : index
      %c0_87 = arith.constant 0 : index
      %193 = vector.load %arg3[%c0_85, %c0_86, %c0_87] : memref<1x8x32xbf16, #tpu.memory_space<vmem>>, vector<1x8x32xbf16>
      %194 = vector.shape_cast %193 : vector<1x8x32xbf16> to vector<8x32xbf16>
      %c0_88 = arith.constant 0 : index
      %c0_89 = arith.constant 0 : index
      %195 = vector.load %arg7[%c0_88, %c0_89] : memref<32x64xbf16, #tpu.memory_space<vmem>>, vector<32x64xbf16>
      %cst_90 = arith.constant dense<0.000000e+00> : vector<8x64xf32>
      %196 = tpu.matmul %194, %195, %cst_90 {dimension_numbers = #tpu.dot_dimension_numbers<[1], [0], [0], [1], [0, 0, 1, 1], [], []>} : vector<8x32xbf16>, vector<32x64xbf16>, vector<8x64xf32> -> vector<8x64xf32>
      %c0_91 = arith.constant 0 : index
      %c0_92 = arith.constant 0 : index
      %197 = vector.load %arg8[%c0_91, %c0_92] : memref<1x64xf32, #tpu.memory_space<vmem>>, vector<1x64xf32>
      %198 = vector.broadcast %197 : vector<1x64xf32> to vector<8x64xf32>
      %199 = arith.addf %196, %198 : vector<8x64xf32>
      %200 = arith.truncf %199 : vector<8x64xf32> to vector<8x64xbf16>
      %201 = vector.extract_strided_slice %200 {offsets = [0, 0], sizes = [8, 4], strides = [1, 1]} : vector<8x64xbf16> to vector<8x4xbf16>
      %c0_93 = arith.constant 0 : index
      %c0_94 = arith.constant 0 : index
      %c0_95 = arith.constant 0 : index
      %202 = vector.load %arg20[%c0_93, %c0_94, %c0_95] : memref<8x8x4xbf16, #tpu.memory_space<vmem>>, vector<1x8x4xbf16>
      %203 = vector.shape_cast %202 : vector<1x8x4xbf16> to vector<8x4xbf16>
      %204 = vector.shape_cast %201 : vector<8x4xbf16> to vector<1x8x4xbf16>
      tpu.vector_store %arg20[%c0_93, %c0_94, %c0_95], %204 {strides = array<i32>} : memref<8x8x4xbf16, #tpu.memory_space<vmem>>, vector<1x8x4xbf16>,
      %205 = vector.extract_strided_slice %200 {offsets = [0, 32], sizes = [8, 4], strides = [1, 1]} : vector<8x64xbf16> to vector<8x4xbf16>
      %c0_96 = arith.constant 0 : index
      %c0_97 = arith.constant 0 : index
      %c0_98 = arith.constant 0 : index
      %206 = vector.load %arg21[%c0_96, %c0_97, %c0_98] : memref<8x8x4xbf16, #tpu.memory_space<vmem>>, vector<1x8x4xbf16>
      %207 = vector.shape_cast %206 : vector<1x8x4xbf16> to vector<8x4xbf16>
      %208 = vector.shape_cast %205 : vector<8x4xbf16> to vector<1x8x4xbf16>
      tpu.vector_store %arg21[%c0_96, %c0_97, %c0_98], %208 {strides = array<i32>} : memref<8x8x4xbf16, #tpu.memory_space<vmem>>, vector<1x8x4xbf16>,
      %209 = vector.extract_strided_slice %200 {offsets = [0, 4], sizes = [8, 4], strides = [1, 1]} : vector<8x64xbf16> to vector<8x4xbf16>
      %c1_99 = arith.constant 1 : index
      %c0_100 = arith.constant 0 : index
      %c0_101 = arith.constant 0 : index
      %210 = vector.load %arg20[%c1_99, %c0_100, %c0_101] : memref<8x8x4xbf16, #tpu.memory_space<vmem>>, vector<1x8x4xbf16>
      %211 = vector.shape_cast %210 : vector<1x8x4xbf16> to vector<8x4xbf16>
      %212 = vector.shape_cast %209 : vector<8x4xbf16> to vector<1x8x4xbf16>
      tpu.vector_store %arg20[%c1_99, %c0_100, %c0_101], %212 {strides = array<i32>} : memref<8x8x4xbf16, #tpu.memory_space<vmem>>, vector<1x8x4xbf16>,
      %213 = vector.extract_strided_slice %200 {offsets = [0, 36], sizes = [8, 4], strides = [1, 1]} : vector<8x64xbf16> to vector<8x4xbf16>
      %c1_102 = arith.constant 1 : index
      %c0_103 = arith.constant 0 : index
      %c0_104 = arith.constant 0 : index
      %214 = vector.load %arg21[%c1_102, %c0_103, %c0_104] : memref<8x8x4xbf16, #tpu.memory_space<vmem>>, vector<1x8x4xbf16>
      %215 = vector.shape_cast %214 : vector<1x8x4xbf16> to vector<8x4xbf16>
      %216 = vector.shape_cast %213 : vector<8x4xbf16> to vector<1x8x4xbf16>
      tpu.vector_store %arg21[%c1_102, %c0_103, %c0_104], %216 {strides = array<i32>} : memref<8x8x4xbf16, #tpu.memory_space<vmem>>, vector<1x8x4xbf16>,
      %217 = vector.extract_strided_slice %200 {offsets = [0, 8], sizes = [8, 4], strides = [1, 1]} : vector<8x64xbf16> to vector<8x4xbf16>
      %c2_105 = arith.constant 2 : index
      %c0_106 = arith.constant 0 : index
      %c0_107 = arith.constant 0 : index
      %218 = vector.load %arg20[%c2_105, %c0_106, %c0_107] : memref<8x8x4xbf16, #tpu.memory_space<vmem>>, vector<1x8x4xbf16>
      %219 = vector.shape_cast %218 : vector<1x8x4xbf16> to vector<8x4xbf16>
      %220 = vector.shape_cast %217 : vector<8x4xbf16> to vector<1x8x4xbf16>
      tpu.vector_store %arg20[%c2_105, %c0_106, %c0_107], %220 {strides = array<i32>} : memref<8x8x4xbf16, #tpu.memory_space<vmem>>, vector<1x8x4xbf16>,
      %221 = vector.extract_strided_slice %200 {offsets = [0, 40], sizes = [8, 4], strides = [1, 1]} : vector<8x64xbf16> to vector<8x4xbf16>
      %c2_108 = arith.constant 2 : index
      %c0_109 = arith.constant 0 : index
      %c0_110 = arith.constant 0 : index
      %222 = vector.load %arg21[%c2_108, %c0_109, %c0_110] : memref<8x8x4xbf16, #tpu.memory_space<vmem>>, vector<1x8x4xbf16>
      %223 = vector.shape_cast %222 : vector<1x8x4xbf16> to vector<8x4xbf16>
      %224 = vector.shape_cast %221 : vector<8x4xbf16> to vector<1x8x4xbf16>
      tpu.vector_store %arg21[%c2_108, %c0_109, %c0_110], %224 {strides = array<i32>} : memref<8x8x4xbf16, #tpu.memory_space<vmem>>, vector<1x8x4xbf16>,
      %225 = vector.extract_strided_slice %200 {offsets = [0, 12], sizes = [8, 4], strides = [1, 1]} : vector<8x64xbf16> to vector<8x4xbf16>
      %c3_111 = arith.constant 3 : index
      %c0_112 = arith.constant 0 : index
      %c0_113 = arith.constant 0 : index
      %226 = vector.load %arg20[%c3_111, %c0_112, %c0_113] : memref<8x8x4xbf16, #tpu.memory_space<vmem>>, vector<1x8x4xbf16>
      %227 = vector.shape_cast %226 : vector<1x8x4xbf16> to vector<8x4xbf16>
      %228 = vector.shape_cast %225 : vector<8x4xbf16> to vector<1x8x4xbf16>
      tpu.vector_store %arg20[%c3_111, %c0_112, %c0_113], %228 {strides = array<i32>} : memref<8x8x4xbf16, #tpu.memory_space<vmem>>, vector<1x8x4xbf16>,
      %229 = vector.extract_strided_slice %200 {offsets = [0, 44], sizes = [8, 4], strides = [1, 1]} : vector<8x64xbf16> to vector<8x4xbf16>
      %c3_114 = arith.constant 3 : index
      %c0_115 = arith.constant 0 : index
      %c0_116 = arith.constant 0 : index
      %230 = vector.load %arg21[%c3_114, %c0_115, %c0_116] : memref<8x8x4xbf16, #tpu.memory_space<vmem>>, vector<1x8x4xbf16>
      %231 = vector.shape_cast %230 : vector<1x8x4xbf16> to vector<8x4xbf16>
      %232 = vector.shape_cast %229 : vector<8x4xbf16> to vector<1x8x4xbf16>
      tpu.vector_store %arg21[%c3_114, %c0_115, %c0_116], %232 {strides = array<i32>} : memref<8x8x4xbf16, #tpu.memory_space<vmem>>, vector<1x8x4xbf16>,
      %233 = vector.extract_strided_slice %200 {offsets = [0, 16], sizes = [8, 4], strides = [1, 1]} : vector<8x64xbf16> to vector<8x4xbf16>
      %c4_117 = arith.constant 4 : index
      %c0_118 = arith.constant 0 : index
      %c0_119 = arith.constant 0 : index
      %234 = vector.load %arg20[%c4_117, %c0_118, %c0_119] : memref<8x8x4xbf16, #tpu.memory_space<vmem>>, vector<1x8x4xbf16>
      %235 = vector.shape_cast %234 : vector<1x8x4xbf16> to vector<8x4xbf16>
      %236 = vector.shape_cast %233 : vector<8x4xbf16> to vector<1x8x4xbf16>
      tpu.vector_store %arg20[%c4_117, %c0_118, %c0_119], %236 {strides = array<i32>} : memref<8x8x4xbf16, #tpu.memory_space<vmem>>, vector<1x8x4xbf16>,
      %237 = vector.extract_strided_slice %200 {offsets = [0, 48], sizes = [8, 4], strides = [1, 1]} : vector<8x64xbf16> to vector<8x4xbf16>
      %c4_120 = arith.constant 4 : index
      %c0_121 = arith.constant 0 : index
      %c0_122 = arith.constant 0 : index
      %238 = vector.load %arg21[%c4_120, %c0_121, %c0_122] : memref<8x8x4xbf16, #tpu.memory_space<vmem>>, vector<1x8x4xbf16>
      %239 = vector.shape_cast %238 : vector<1x8x4xbf16> to vector<8x4xbf16>
      %240 = vector.shape_cast %237 : vector<8x4xbf16> to vector<1x8x4xbf16>
      tpu.vector_store %arg21[%c4_120, %c0_121, %c0_122], %240 {strides = array<i32>} : memref<8x8x4xbf16, #tpu.memory_space<vmem>>, vector<1x8x4xbf16>,
      %241 = vector.extract_strided_slice %200 {offsets = [0, 20], sizes = [8, 4], strides = [1, 1]} : vector<8x64xbf16> to vector<8x4xbf16>
      %c5_123 = arith.constant 5 : index
      %c0_124 = arith.constant 0 : index
      %c0_125 = arith.constant 0 : index
      %242 = vector.load %arg20[%c5_123, %c0_124, %c0_125] : memref<8x8x4xbf16, #tpu.memory_space<vmem>>, vector<1x8x4xbf16>
      %243 = vector.shape_cast %242 : vector<1x8x4xbf16> to vector<8x4xbf16>
      %244 = vector.shape_cast %241 : vector<8x4xbf16> to vector<1x8x4xbf16>
      tpu.vector_store %arg20[%c5_123, %c0_124, %c0_125], %244 {strides = array<i32>} : memref<8x8x4xbf16, #tpu.memory_space<vmem>>, vector<1x8x4xbf16>,
      %245 = vector.extract_strided_slice %200 {offsets = [0, 52], sizes = [8, 4], strides = [1, 1]} : vector<8x64xbf16> to vector<8x4xbf16>
      %c5_126 = arith.constant 5 : index
      %c0_127 = arith.constant 0 : index
      %c0_128 = arith.constant 0 : index
      %246 = vector.load %arg21[%c5_126, %c0_127, %c0_128] : memref<8x8x4xbf16, #tpu.memory_space<vmem>>, vector<1x8x4xbf16>
      %247 = vector.shape_cast %246 : vector<1x8x4xbf16> to vector<8x4xbf16>
      %248 = vector.shape_cast %245 : vector<8x4xbf16> to vector<1x8x4xbf16>
      tpu.vector_store %arg21[%c5_126, %c0_127, %c0_128], %248 {strides = array<i32>} : memref<8x8x4xbf16, #tpu.memory_space<vmem>>, vector<1x8x4xbf16>,
      %249 = vector.extract_strided_slice %200 {offsets = [0, 24], sizes = [8, 4], strides = [1, 1]} : vector<8x64xbf16> to vector<8x4xbf16>
      %c6_129 = arith.constant 6 : index
      %c0_130 = arith.constant 0 : index
      %c0_131 = arith.constant 0 : index
      %250 = vector.load %arg20[%c6_129, %c0_130, %c0_131] : memref<8x8x4xbf16, #tpu.memory_space<vmem>>, vector<1x8x4xbf16>
      %251 = vector.shape_cast %250 : vector<1x8x4xbf16> to vector<8x4xbf16>
      %252 = vector.shape_cast %249 : vector<8x4xbf16> to vector<1x8x4xbf16>
      tpu.vector_store %arg20[%c6_129, %c0_130, %c0_131], %252 {strides = array<i32>} : memref<8x8x4xbf16, #tpu.memory_space<vmem>>, vector<1x8x4xbf16>,
      %253 = vector.extract_strided_slice %200 {offsets = [0, 56], sizes = [8, 4], strides = [1, 1]} : vector<8x64xbf16> to vector<8x4xbf16>
      %c6_132 = arith.constant 6 : index
      %c0_133 = arith.constant 0 : index
      %c0_134 = arith.constant 0 : index
      %254 = vector.load %arg21[%c6_132, %c0_133, %c0_134] : memref<8x8x4xbf16, #tpu.memory_space<vmem>>, vector<1x8x4xbf16>
      %255 = vector.shape_cast %254 : vector<1x8x4xbf16> to vector<8x4xbf16>
      %256 = vector.shape_cast %253 : vector<8x4xbf16> to vector<1x8x4xbf16>
      tpu.vector_store %arg21[%c6_132, %c0_133, %c0_134], %256 {strides = array<i32>} : memref<8x8x4xbf16, #tpu.memory_space<vmem>>, vector<1x8x4xbf16>,
      %257 = vector.extract_strided_slice %200 {offsets = [0, 28], sizes = [8, 4], strides = [1, 1]} : vector<8x64xbf16> to vector<8x4xbf16>
      %c7_135 = arith.constant 7 : index
      %c0_136 = arith.constant 0 : index
      %c0_137 = arith.constant 0 : index
      %258 = vector.load %arg20[%c7_135, %c0_136, %c0_137] : memref<8x8x4xbf16, #tpu.memory_space<vmem>>, vector<1x8x4xbf16>
      %259 = vector.shape_cast %258 : vector<1x8x4xbf16> to vector<8x4xbf16>
      %260 = vector.shape_cast %257 : vector<8x4xbf16> to vector<1x8x4xbf16>
      tpu.vector_store %arg20[%c7_135, %c0_136, %c0_137], %260 {strides = array<i32>} : memref<8x8x4xbf16, #tpu.memory_space<vmem>>, vector<1x8x4xbf16>,
      %261 = vector.extract_strided_slice %200 {offsets = [0, 60], sizes = [8, 4], strides = [1, 1]} : vector<8x64xbf16> to vector<8x4xbf16>
      %c7_138 = arith.constant 7 : index
      %c0_139 = arith.constant 0 : index
      %c0_140 = arith.constant 0 : index
      %262 = vector.load %arg21[%c7_138, %c0_139, %c0_140] : memref<8x8x4xbf16, #tpu.memory_space<vmem>>, vector<1x8x4xbf16>
      %263 = vector.shape_cast %262 : vector<1x8x4xbf16> to vector<8x4xbf16>
      %264 = vector.shape_cast %261 : vector<8x4xbf16> to vector<1x8x4xbf16>
      tpu.vector_store %arg21[%c7_138, %c0_139, %c0_140], %264 {strides = array<i32>} : memref<8x8x4xbf16, #tpu.memory_space<vmem>>, vector<1x8x4xbf16>,
    } else {
    }
    %5 = arith.truncf %1 : vector<8x32xf32> to vector<8x32xbf16>
    %c0_3 = arith.constant 0 : index
    %c0_4 = arith.constant 0 : index
    %6 = vector.load %arg5[%c0_3, %c0_4] : memref<32x32xbf16, #tpu.memory_space<vmem>>, vector<32x32xbf16>
    %cst = arith.constant dense<0.000000e+00> : vector<8x32xf32>
    %7 = tpu.matmul %5, %6, %cst {dimension_numbers = #tpu.dot_dimension_numbers<[1], [0], [0], [1], [0, 0, 1, 1], [], []>} : vector<8x32xbf16>, vector<32x32xbf16>, vector<8x32xf32> -> vector<8x32xf32>
    %c0_5 = arith.constant 0 : index
    %c0_6 = arith.constant 0 : index
    %8 = vector.load %arg6[%c0_5, %c0_6] : memref<1x32xf32, #tpu.memory_space<vmem>>, vector<1x32xf32>
    %9 = vector.broadcast %8 : vector<1x32xf32> to vector<8x32xf32>
    %10 = arith.addf %7, %9 : vector<8x32xf32>
    %11 = arith.truncf %10 : vector<8x32xf32> to vector<8x32xbf16>
    %12 = vector.extract_strided_slice %11 {offsets = [0, 0], sizes = [8, 4], strides = [1, 1]} : vector<8x32xbf16> to vector<8x4xbf16>
    %13 = vector.extract_strided_slice %11 {offsets = [0, 4], sizes = [8, 4], strides = [1, 1]} : vector<8x32xbf16> to vector<8x4xbf16>
    %14 = vector.extract_strided_slice %11 {offsets = [0, 8], sizes = [8, 4], strides = [1, 1]} : vector<8x32xbf16> to vector<8x4xbf16>
    %15 = vector.extract_strided_slice %11 {offsets = [0, 12], sizes = [8, 4], strides = [1, 1]} : vector<8x32xbf16> to vector<8x4xbf16>
    %16 = vector.extract_strided_slice %11 {offsets = [0, 16], sizes = [8, 4], strides = [1, 1]} : vector<8x32xbf16> to vector<8x4xbf16>
    %17 = vector.extract_strided_slice %11 {offsets = [0, 20], sizes = [8, 4], strides = [1, 1]} : vector<8x32xbf16> to vector<8x4xbf16>
    %18 = vector.extract_strided_slice %11 {offsets = [0, 24], sizes = [8, 4], strides = [1, 1]} : vector<8x32xbf16> to vector<8x4xbf16>
    %19 = vector.extract_strided_slice %11 {offsets = [0, 28], sizes = [8, 4], strides = [1, 1]} : vector<8x32xbf16> to vector<8x4xbf16>
    %20 = vector.shape_cast %12 : vector<8x4xbf16> to vector<1x8x4xbf16>
    %21 = vector.shape_cast %13 : vector<8x4xbf16> to vector<1x8x4xbf16>
    %22 = vector.shape_cast %14 : vector<8x4xbf16> to vector<1x8x4xbf16>
    %23 = vector.shape_cast %15 : vector<8x4xbf16> to vector<1x8x4xbf16>
    %24 = vector.shape_cast %16 : vector<8x4xbf16> to vector<1x8x4xbf16>
    %25 = vector.shape_cast %17 : vector<8x4xbf16> to vector<1x8x4xbf16>
    %26 = vector.shape_cast %18 : vector<8x4xbf16> to vector<1x8x4xbf16>
    %27 = vector.shape_cast %19 : vector<8x4xbf16> to vector<1x8x4xbf16>
    %28 = tpu.concatenate %20, %21, %22, %23, %24, %25, %26, %27 in 0 : vector<1x8x4xbf16>, vector<1x8x4xbf16>, vector<1x8x4xbf16>, vector<1x8x4xbf16>, vector<1x8x4xbf16>, vector<1x8x4xbf16>, vector<1x8x4xbf16>, vector<1x8x4xbf16> -> vector<8x8x4xbf16>
    %cst_7 = arith.constant 0xFF800000 : f32
    %29 = vector.broadcast %cst_7 : f32 to vector<8x8x1xf32>
    %cst_8 = arith.constant 0.000000e+00 : f32
    %30 = vector.broadcast %cst_8 : f32 to vector<8x8x1xf32>
    %cst_9 = arith.constant 0.000000e+00 : f32
    %31 = vector.broadcast %cst_9 : f32 to vector<8x8x4xf32>
    %c0_10 = arith.constant 0 : index
    %c0_11 = arith.constant 0 : index
    %c0_12 = arith.constant 0 : index
    %32 = vector.load %arg20[%c0_10, %c0_11, %c0_12] : memref<8x8x4xbf16, #tpu.memory_space<vmem>>, vector<8x8x4xbf16>
    %c0_13 = arith.constant 0 : index
    %c0_14 = arith.constant 0 : index
    %c0_15 = arith.constant 0 : index
    %33 = vector.load %arg21[%c0_13, %c0_14, %c0_15] : memref<8x8x4xbf16, #tpu.memory_space<vmem>>, vector<8x8x4xbf16>
    %c0_16 = arith.constant 0 : index
    %c0_17 = arith.constant 0 : index
    %c0_18 = arith.constant 0 : index
    %34 = vector.load %arg4[%c0_16, %c0_17, %c0_18] : memref<1x8x8xi8, #tpu.memory_space<vmem>>, vector<1x8x8xi8>
    %35 = vector.shape_cast %34 : vector<1x8x8xi8> to vector<8x8xi8>
    "tpu.trace_start"() <{level = 10 : i32, message = "hqd,hkd->hqk"}> : () -> ()
    %cst_19 = arith.constant dense<0.000000e+00> : vector<8x8x8xf32>
    %36 = tpu.matmul %28, %32, %cst_19 {dimension_numbers = #tpu.dot_dimension_numbers<[2], [2], [1], [1], [0, 0, 0, 1, 1, 1], [0], [0]>} : vector<8x8x4xbf16>, vector<8x8x4xbf16>, vector<8x8x8xf32> -> vector<8x8x8xf32>
    "tpu.trace_stop"() : () -> ()
    %37 = vector.shape_cast %35 : vector<8x8xi8> to vector<1x8x8xi8>
    %c0_i8 = arith.constant 0 : i8
    %38 = vector.broadcast %c0_i8 : i8 to vector<1x8x8xi8>
    %39 = arith.cmpi ne, %37, %38 : vector<1x8x8xi8>
    %cst_20 = arith.constant -1.000000e+30 : f32
    %40 = vector.shape_cast %39 : vector<1x8x8xi1> to vector<1x8x8xi1>
    %41 = vector.broadcast %40 : vector<1x8x8xi1> to vector<8x8x8xi1>
    %42 = vector.broadcast %cst_20 : f32 to vector<8x8x8xf32>
    %43 = arith.select %41, %36, %42 : vector<8x8x8xi1>, vector<8x8x8xf32>
    %cst_21 = arith.constant dense<0xFF800000> : vector<8x8xf32>
    %44 = vector.multi_reduction <maximumf>, %43, %cst_21 [2] : vector<8x8x8xf32> to vector<8x8xf32>
    %45 = vector.shape_cast %44 : vector<8x8xf32> to vector<8x8x1xf32>
    %46 = arith.maximumf %29, %45 : vector<8x8x1xf32>
    %47 = arith.subf %29, %46 : vector<8x8x1xf32>
    %48 = math.exp %47 : vector<8x8x1xf32>
    %49 = vector.broadcast %46 : vector<8x8x1xf32> to vector<8x8x8xf32>
    %50 = arith.subf %43, %49 : vector<8x8x8xf32>
    %51 = math.exp %50 : vector<8x8x8xf32>
    %52 = arith.mulf %48, %30 : vector<8x8x1xf32>
    %cst_22 = arith.constant dense<0.000000e+00> : vector<8x8xf32>
    %53 = vector.multi_reduction <add>, %51, %cst_22 [2] : vector<8x8x8xf32> to vector<8x8xf32>
    %54 = vector.shape_cast %53 : vector<8x8xf32> to vector<8x8x1xf32>
    %55 = arith.addf %52, %54 : vector<8x8x1xf32>
    %56 = vector.broadcast %48 : vector<8x8x1xf32> to vector<8x8x4xf32>
    %57 = arith.mulf %56, %31 : vector<8x8x4xf32>
    %58 = arith.truncf %51 : vector<8x8x8xf32> to vector<8x8x8xbf16>
    "tpu.trace_start"() <{level = 10 : i32, message = "hqk,hkd->hqd"}> : () -> ()
    %cst_23 = arith.constant dense<0.000000e+00> : vector<8x8x4xf32>
    %59 = tpu.matmul %58, %33, %cst_23 {dimension_numbers = #tpu.dot_dimension_numbers<[2], [1], [1], [2], [0, 0, 0, 1, 1, 2], [0], [0]>} : vector<8x8x8xbf16>, vector<8x8x4xbf16>, vector<8x8x4xf32> -> vector<8x8x4xf32>
    "tpu.trace_stop"() : () -> ()
    %60 = arith.addf %57, %59 : vector<8x8x4xf32>
    %cst_24 = arith.constant 1.000000e-30 : f32
    %61 = vector.broadcast %cst_24 : f32 to vector<8x8x1xf32>
    %62 = arith.maximumf %55, %61 : vector<8x8x1xf32>
    %63 = tpu.reciprocal %62 {approx = true} : vector<8x8x1xf32> -> vector<8x8x1xf32>
    %64 = vector.broadcast %63 : vector<8x8x1xf32> to vector<8x8x4xf32>
    %65 = arith.mulf %60, %64 : vector<8x8x4xf32>
    %cst_25 = arith.constant 0.000000e+00 : f32
    %66 = vector.broadcast %cst_25 : f32 to vector<8x32xf32>
    %67 = vector.extract_strided_slice %65 {offsets = [0, 0, 0], sizes = [1, 8, 4], strides = [1, 1, 1]} : vector<8x8x4xf32> to vector<1x8x4xf32>
    %68 = vector.shape_cast %67 : vector<1x8x4xf32> to vector<8x4xf32>
    %69 = arith.truncf %68 : vector<8x4xf32> to vector<8x4xbf16>
    %c0_26 = arith.constant 0 : index
    %c0_27 = arith.constant 0 : index
    %c0_28 = arith.constant 0 : index
    %70 = vector.load %arg9[%c0_26, %c0_27, %c0_28] : memref<8x4x32xbf16, #tpu.memory_space<vmem>>, vector<1x4x32xbf16>
    %71 = vector.shape_cast %70 : vector<1x4x32xbf16> to vector<4x32xbf16>
    %cst_29 = arith.constant dense<0.000000e+00> : vector<8x32xf32>
    %72 = tpu.matmul %69, %71, %cst_29 {dimension_numbers = #tpu.dot_dimension_numbers<[1], [0], [0], [1], [0, 0, 1, 1], [], []>} : vector<8x4xbf16>, vector<4x32xbf16>, vector<8x32xf32> -> vector<8x32xf32>
    %73 = arith.addf %66, %72 : vector<8x32xf32>
    %74 = vector.extract_strided_slice %65 {offsets = [1, 0, 0], sizes = [1, 8, 4], strides = [1, 1, 1]} : vector<8x8x4xf32> to vector<1x8x4xf32>
    %75 = vector.shape_cast %74 : vector<1x8x4xf32> to vector<8x4xf32>
    %76 = arith.truncf %75 : vector<8x4xf32> to vector<8x4xbf16>
    %c1 = arith.constant 1 : index
    %c0_30 = arith.constant 0 : index
    %c0_31 = arith.constant 0 : index
    %77 = vector.load %arg9[%c1, %c0_30, %c0_31] : memref<8x4x32xbf16, #tpu.memory_space<vmem>>, vector<1x4x32xbf16>
    %78 = vector.shape_cast %77 : vector<1x4x32xbf16> to vector<4x32xbf16>
    %cst_32 = arith.constant dense<0.000000e+00> : vector<8x32xf32>
    %79 = tpu.matmul %76, %78, %cst_32 {dimension_numbers = #tpu.dot_dimension_numbers<[1], [0], [0], [1], [0, 0, 1, 1], [], []>} : vector<8x4xbf16>, vector<4x32xbf16>, vector<8x32xf32> -> vector<8x32xf32>
    %80 = arith.addf %73, %79 : vector<8x32xf32>
    %81 = vector.extract_strided_slice %65 {offsets = [2, 0, 0], sizes = [1, 8, 4], strides = [1, 1, 1]} : vector<8x8x4xf32> to vector<1x8x4xf32>
    %82 = vector.shape_cast %81 : vector<1x8x4xf32> to vector<8x4xf32>
    %83 = arith.truncf %82 : vector<8x4xf32> to vector<8x4xbf16>
    %c2 = arith.constant 2 : index
    %c0_33 = arith.constant 0 : index
    %c0_34 = arith.constant 0 : index
    %84 = vector.load %arg9[%c2, %c0_33, %c0_34] : memref<8x4x32xbf16, #tpu.memory_space<vmem>>, vector<1x4x32xbf16>
    %85 = vector.shape_cast %84 : vector<1x4x32xbf16> to vector<4x32xbf16>
    %cst_35 = arith.constant dense<0.000000e+00> : vector<8x32xf32>
    %86 = tpu.matmul %83, %85, %cst_35 {dimension_numbers = #tpu.dot_dimension_numbers<[1], [0], [0], [1], [0, 0, 1, 1], [], []>} : vector<8x4xbf16>, vector<4x32xbf16>, vector<8x32xf32> -> vector<8x32xf32>
    %87 = arith.addf %80, %86 : vector<8x32xf32>
    %88 = vector.extract_strided_slice %65 {offsets = [3, 0, 0], sizes = [1, 8, 4], strides = [1, 1, 1]} : vector<8x8x4xf32> to vector<1x8x4xf32>
    %89 = vector.shape_cast %88 : vector<1x8x4xf32> to vector<8x4xf32>
    %90 = arith.truncf %89 : vector<8x4xf32> to vector<8x4xbf16>
    %c3 = arith.constant 3 : index
    %c0_36 = arith.constant 0 : index
    %c0_37 = arith.constant 0 : index
    %91 = vector.load %arg9[%c3, %c0_36, %c0_37] : memref<8x4x32xbf16, #tpu.memory_space<vmem>>, vector<1x4x32xbf16>
    %92 = vector.shape_cast %91 : vector<1x4x32xbf16> to vector<4x32xbf16>
    %cst_38 = arith.constant dense<0.000000e+00> : vector<8x32xf32>
    %93 = tpu.matmul %90, %92, %cst_38 {dimension_numbers = #tpu.dot_dimension_numbers<[1], [0], [0], [1], [0, 0, 1, 1], [], []>} : vector<8x4xbf16>, vector<4x32xbf16>, vector<8x32xf32> -> vector<8x32xf32>
    %94 = arith.addf %87, %93 : vector<8x32xf32>
    %95 = vector.extract_strided_slice %65 {offsets = [4, 0, 0], sizes = [1, 8, 4], strides = [1, 1, 1]} : vector<8x8x4xf32> to vector<1x8x4xf32>
    %96 = vector.shape_cast %95 : vector<1x8x4xf32> to vector<8x4xf32>
    %97 = arith.truncf %96 : vector<8x4xf32> to vector<8x4xbf16>
    %c4 = arith.constant 4 : index
    %c0_39 = arith.constant 0 : index
    %c0_40 = arith.constant 0 : index
    %98 = vector.load %arg9[%c4, %c0_39, %c0_40] : memref<8x4x32xbf16, #tpu.memory_space<vmem>>, vector<1x4x32xbf16>
    %99 = vector.shape_cast %98 : vector<1x4x32xbf16> to vector<4x32xbf16>
    %cst_41 = arith.constant dense<0.000000e+00> : vector<8x32xf32>
    %100 = tpu.matmul %97, %99, %cst_41 {dimension_numbers = #tpu.dot_dimension_numbers<[1], [0], [0], [1], [0, 0, 1, 1], [], []>} : vector<8x4xbf16>, vector<4x32xbf16>, vector<8x32xf32> -> vector<8x32xf32>
    %101 = arith.addf %94, %100 : vector<8x32xf32>
    %102 = vector.extract_strided_slice %65 {offsets = [5, 0, 0], sizes = [1, 8, 4], strides = [1, 1, 1]} : vector<8x8x4xf32> to vector<1x8x4xf32>
    %103 = vector.shape_cast %102 : vector<1x8x4xf32> to vector<8x4xf32>
    %104 = arith.truncf %103 : vector<8x4xf32> to vector<8x4xbf16>
    %c5 = arith.constant 5 : index
    %c0_42 = arith.constant 0 : index
    %c0_43 = arith.constant 0 : index
    %105 = vector.load %arg9[%c5, %c0_42, %c0_43] : memref<8x4x32xbf16, #tpu.memory_space<vmem>>, vector<1x4x32xbf16>
    %106 = vector.shape_cast %105 : vector<1x4x32xbf16> to vector<4x32xbf16>
    %cst_44 = arith.constant dense<0.000000e+00> : vector<8x32xf32>
    %107 = tpu.matmul %104, %106, %cst_44 {dimension_numbers = #tpu.dot_dimension_numbers<[1], [0], [0], [1], [0, 0, 1, 1], [], []>} : vector<8x4xbf16>, vector<4x32xbf16>, vector<8x32xf32> -> vector<8x32xf32>
    %108 = arith.addf %101, %107 : vector<8x32xf32>
    %109 = vector.extract_strided_slice %65 {offsets = [6, 0, 0], sizes = [1, 8, 4], strides = [1, 1, 1]} : vector<8x8x4xf32> to vector<1x8x4xf32>
    %110 = vector.shape_cast %109 : vector<1x8x4xf32> to vector<8x4xf32>
    %111 = arith.truncf %110 : vector<8x4xf32> to vector<8x4xbf16>
    %c6 = arith.constant 6 : index
    %c0_45 = arith.constant 0 : index
    %c0_46 = arith.constant 0 : index
    %112 = vector.load %arg9[%c6, %c0_45, %c0_46] : memref<8x4x32xbf16, #tpu.memory_space<vmem>>, vector<1x4x32xbf16>
    %113 = vector.shape_cast %112 : vector<1x4x32xbf16> to vector<4x32xbf16>
    %cst_47 = arith.constant dense<0.000000e+00> : vector<8x32xf32>
    %114 = tpu.matmul %111, %113, %cst_47 {dimension_numbers = #tpu.dot_dimension_numbers<[1], [0], [0], [1], [0, 0, 1, 1], [], []>} : vector<8x4xbf16>, vector<4x32xbf16>, vector<8x32xf32> -> vector<8x32xf32>
    %115 = arith.addf %108, %114 : vector<8x32xf32>
    %116 = vector.extract_strided_slice %65 {offsets = [7, 0, 0], sizes = [1, 8, 4], strides = [1, 1, 1]} : vector<8x8x4xf32> to vector<1x8x4xf32>
    %117 = vector.shape_cast %116 : vector<1x8x4xf32> to vector<8x4xf32>
    %118 = arith.truncf %117 : vector<8x4xf32> to vector<8x4xbf16>
    %c7 = arith.constant 7 : index
    %c0_48 = arith.constant 0 : index
    %c0_49 = arith.constant 0 : index
    %119 = vector.load %arg9[%c7, %c0_48, %c0_49] : memref<8x4x32xbf16, #tpu.memory_space<vmem>>, vector<1x4x32xbf16>
    %120 = vector.shape_cast %119 : vector<1x4x32xbf16> to vector<4x32xbf16>
    %cst_50 = arith.constant dense<0.000000e+00> : vector<8x32xf32>
    %121 = tpu.matmul %118, %120, %cst_50 {dimension_numbers = #tpu.dot_dimension_numbers<[1], [0], [0], [1], [0, 0, 1, 1], [], []>} : vector<8x4xbf16>, vector<4x32xbf16>, vector<8x32xf32> -> vector<8x32xf32>
    %122 = arith.addf %115, %121 : vector<8x32xf32>
    %c0_51 = arith.constant 0 : index
    %c0_52 = arith.constant 0 : index
    %123 = vector.load %arg10[%c0_51, %c0_52] : memref<1x32xf32, #tpu.memory_space<vmem>>, vector<1x32xf32>
    %124 = vector.broadcast %123 : vector<1x32xf32> to vector<8x32xf32>
    %125 = arith.addf %122, %124 : vector<8x32xf32>
    %126 = arith.addf %1, %125 : vector<8x32xf32>
    %c0_53 = arith.constant 0 : index
    %c0_54 = arith.constant 0 : index
    %127 = vector.load %arg11[%c0_53, %c0_54] : memref<1x32xf32, #tpu.memory_space<vmem>>, vector<1x32xf32>
    %c0_55 = arith.constant 0 : index
    %c0_56 = arith.constant 0 : index
    %128 = vector.load %arg12[%c0_55, %c0_56] : memref<1x32xf32, #tpu.memory_space<vmem>>, vector<1x32xf32>
    %cst_57 = arith.constant dense<0.000000e+00> : vector<8xf32>
    %129 = vector.multi_reduction <add>, %126, %cst_57 [1] : vector<8x32xf32> to vector<8xf32>
    %130 = vector.shape_cast %129 : vector<8xf32> to vector<8x1xf32>
    %cst_58 = arith.constant 3.200000e+01 : f32
    %131 = vector.broadcast %cst_58 : f32 to vector<8x1xf32>
    %132 = arith.divf %130, %131 : vector<8x1xf32>
    %133 = vector.broadcast %132 : vector<8x1xf32> to vector<8x32xf32>
    %134 = arith.subf %126, %133 : vector<8x32xf32>
    %135 = arith.mulf %134, %134 : vector<8x32xf32>
    %cst_59 = arith.constant dense<0.000000e+00> : vector<8xf32>
    %136 = vector.multi_reduction <add>, %135, %cst_59 [1] : vector<8x32xf32> to vector<8xf32>
    %137 = vector.shape_cast %136 : vector<8xf32> to vector<8x1xf32>
    %cst_60 = arith.constant 3.200000e+01 : f32
    %138 = vector.broadcast %cst_60 : f32 to vector<8x1xf32>
    %139 = arith.divf %137, %138 : vector<8x1xf32>
    %140 = vector.broadcast %132 : vector<8x1xf32> to vector<8x32xf32>
    %141 = arith.subf %126, %140 : vector<8x32xf32>
    %cst_61 = arith.constant 9.99999974E-6 : f32
    %142 = vector.broadcast %cst_61 : f32 to vector<8x1xf32>
    %143 = arith.addf %139, %142 : vector<8x1xf32>
    %144 = math.rsqrt %143 : vector<8x1xf32>
    %145 = vector.broadcast %144 : vector<8x1xf32> to vector<8x32xf32>
    %146 = arith.mulf %141, %145 : vector<8x32xf32>
    %147 = vector.broadcast %127 : vector<1x32xf32> to vector<8x32xf32>
    %148 = arith.mulf %146, %147 : vector<8x32xf32>
    %149 = vector.broadcast %128 : vector<1x32xf32> to vector<8x32xf32>
    %150 = arith.addf %148, %149 : vector<8x32xf32>
    %151 = arith.truncf %150 : vector<8x32xf32> to vector<8x32xbf16>
    %c0_62 = arith.constant 0 : index
    %c0_63 = arith.constant 0 : index
    %152 = vector.load %arg13[%c0_62, %c0_63] : memref<32x64xbf16, #tpu.memory_space<vmem>>, vector<32x64xbf16>
    %cst_64 = arith.constant dense<0.000000e+00> : vector<8x64xf32>
    %153 = tpu.matmul %151, %152, %cst_64 {dimension_numbers = #tpu.dot_dimension_numbers<[1], [0], [0], [1], [0, 0, 1, 1], [], []>} : vector<8x32xbf16>, vector<32x64xbf16>, vector<8x64xf32> -> vector<8x64xf32>
    %c0_65 = arith.constant 0 : index
    %c0_66 = arith.constant 0 : index
    %154 = vector.load %arg14[%c0_65, %c0_66] : memref<1x64xf32, #tpu.memory_space<vmem>>, vector<1x64xf32>
    %155 = vector.broadcast %154 : vector<1x64xf32> to vector<8x64xf32>
    %156 = arith.addf %153, %155 : vector<8x64xf32>
    %cst_67 = arith.constant 0.000000e+00 : f32
    %157 = vector.broadcast %cst_67 : f32 to vector<8x64xf32>
    %158 = arith.maximumf %156, %157 : vector<8x64xf32>
    %159 = arith.truncf %158 : vector<8x64xf32> to vector<8x64xbf16>
    %c0_68 = arith.constant 0 : index
    %c0_69 = arith.constant 0 : index
    %160 = vector.load %arg15[%c0_68, %c0_69] : memref<64x32xbf16, #tpu.memory_space<vmem>>, vector<64x32xbf16>
    %cst_70 = arith.constant dense<0.000000e+00> : vector<8x32xf32>
    %161 = tpu.matmul %159, %160, %cst_70 {dimension_numbers = #tpu.dot_dimension_numbers<[1], [0], [0], [1], [0, 0, 1, 1], [], []>} : vector<8x64xbf16>, vector<64x32xbf16>, vector<8x32xf32> -> vector<8x32xf32>
    %c0_71 = arith.constant 0 : index
    %c0_72 = arith.constant 0 : index
    %162 = vector.load %arg16[%c0_71, %c0_72] : memref<1x32xf32, #tpu.memory_space<vmem>>, vector<1x32xf32>
    %163 = vector.broadcast %162 : vector<1x32xf32> to vector<8x32xf32>
    %164 = arith.addf %161, %163 : vector<8x32xf32>
    %165 = arith.addf %150, %164 : vector<8x32xf32>
    %c0_73 = arith.constant 0 : index
    %c0_74 = arith.constant 0 : index
    %166 = vector.load %arg17[%c0_73, %c0_74] : memref<1x32xf32, #tpu.memory_space<vmem>>, vector<1x32xf32>
    %c0_75 = arith.constant 0 : index
    %c0_76 = arith.constant 0 : index
    %167 = vector.load %arg18[%c0_75, %c0_76] : memref<1x32xf32, #tpu.memory_space<vmem>>, vector<1x32xf32>
    %cst_77 = arith.constant dense<0.000000e+00> : vector<8xf32>
    %168 = vector.multi_reduction <add>, %165, %cst_77 [1] : vector<8x32xf32> to vector<8xf32>
    %169 = vector.shape_cast %168 : vector<8xf32> to vector<8x1xf32>
    %cst_78 = arith.constant 3.200000e+01 : f32
    %170 = vector.broadcast %cst_78 : f32 to vector<8x1xf32>
    %171 = arith.divf %169, %170 : vector<8x1xf32>
    %172 = vector.broadcast %171 : vector<8x1xf32> to vector<8x32xf32>
    %173 = arith.subf %165, %172 : vector<8x32xf32>
    %174 = arith.mulf %173, %173 : vector<8x32xf32>
    %cst_79 = arith.constant dense<0.000000e+00> : vector<8xf32>
    %175 = vector.multi_reduction <add>, %174, %cst_79 [1] : vector<8x32xf32> to vector<8xf32>
    %176 = vector.shape_cast %175 : vector<8xf32> to vector<8x1xf32>
    %cst_80 = arith.constant 3.200000e+01 : f32
    %177 = vector.broadcast %cst_80 : f32 to vector<8x1xf32>
    %178 = arith.divf %176, %177 : vector<8x1xf32>
    %179 = vector.broadcast %171 : vector<8x1xf32> to vector<8x32xf32>
    %180 = arith.subf %165, %179 : vector<8x32xf32>
    %cst_81 = arith.constant 9.99999974E-6 : f32
    %181 = vector.broadcast %cst_81 : f32 to vector<8x1xf32>
    %182 = arith.addf %178, %181 : vector<8x1xf32>
    %183 = math.rsqrt %182 : vector<8x1xf32>
    %184 = vector.broadcast %183 : vector<8x1xf32> to vector<8x32xf32>
    %185 = arith.mulf %180, %184 : vector<8x32xf32>
    %186 = vector.broadcast %166 : vector<1x32xf32> to vector<8x32xf32>
    %187 = arith.mulf %185, %186 : vector<8x32xf32>
    %188 = vector.broadcast %167 : vector<1x32xf32> to vector<8x32xf32>
    %189 = arith.addf %187, %188 : vector<8x32xf32>
    %c0_82 = arith.constant 0 : index
    %c0_83 = arith.constant 0 : index
    %c0_84 = arith.constant 0 : index
    %190 = vector.load %arg19[%c0_82, %c0_83, %c0_84] : memref<1x8x32xf32, #tpu.memory_space<vmem>>, vector<1x8x32xf32>
    %191 = vector.shape_cast %190 : vector<1x8x32xf32> to vector<8x32xf32>
    %192 = vector.shape_cast %189 : vector<8x32xf32> to vector<1x8x32xf32>
    tpu.vector_store %arg19[%c0_82, %c0_83, %c0_84], %192 {strides = array<i32>} : memref<1x8x32xf32, #tpu.memory_space<vmem>>, vector<1x8x32xf32>,
    return
  }
  func.func @transform_0(%arg0: i32, %arg1: i32) -> (i32, i32, i32) {
    %c0_i32 = arith.constant 0 : i32
    %c0_i32_0 = arith.constant 0 : i32
    return %arg0, %arg1, %c0_i32 : i32, i32, i32
  }
  func.func @transform_1(%arg0: i32, %arg1: i32) -> (i32, i32, i32) {
    %c0_i32 = arith.constant 0 : i32
    %c0_i32_0 = arith.constant 0 : i32
    %c0_i32_1 = arith.constant 0 : i32
    return %arg0, %c0_i32, %c0_i32_0 : i32, i32, i32
  }
  func.func @transform_2(%arg0: i32, %arg1: i32) -> (i32, i32, i32) {
    %c0_i32 = arith.constant 0 : i32
    %c0_i32_0 = arith.constant 0 : i32
    return %arg0, %arg1, %c0_i32 : i32, i32, i32
  }
  func.func @transform_3(%arg0: i32, %arg1: i32) -> (i32, i32) {
    %c0_i32 = arith.constant 0 : i32
    %c0_i32_0 = arith.constant 0 : i32
    %c0_i32_1 = arith.constant 0 : i32
    return %c0_i32, %c0_i32_0 : i32, i32
  }
  func.func @transform_4(%arg0: i32, %arg1: i32) -> (i32, i32) {
    %c0_i32 = arith.constant 0 : i32
    %c0_i32_0 = arith.constant 0 : i32
    %c0_i32_1 = arith.constant 0 : i32
    return %c0_i32, %c0_i32_0 : i32, i32
  }
  func.func @transform_5(%arg0: i32, %arg1: i32) -> (i32, i32) {
    %c0_i32 = arith.constant 0 : i32
    %c0_i32_0 = arith.constant 0 : i32
    %c0_i32_1 = arith.constant 0 : i32
    return %c0_i32, %c0_i32_0 : i32, i32
  }
  func.func @transform_6(%arg0: i32, %arg1: i32) -> (i32, i32) {
    %c0_i32 = arith.constant 0 : i32
    %c0_i32_0 = arith.constant 0 : i32
    %c0_i32_1 = arith.constant 0 : i32
    return %c0_i32, %c0_i32_0 : i32, i32
  }
  func.func @transform_7(%arg0: i32, %arg1: i32) -> (i32, i32, i32) {
    %c0_i32 = arith.constant 0 : i32
    %c0_i32_0 = arith.constant 0 : i32
    %c0_i32_1 = arith.constant 0 : i32
    %c0_i32_2 = arith.constant 0 : i32
    return %c0_i32, %c0_i32_0, %c0_i32_1 : i32, i32, i32
  }
  func.func @transform_8(%arg0: i32, %arg1: i32) -> (i32, i32) {
    %c0_i32 = arith.constant 0 : i32
    %c0_i32_0 = arith.constant 0 : i32
    %c0_i32_1 = arith.constant 0 : i32
    return %c0_i32, %c0_i32_0 : i32, i32
  }
  func.func @transform_9(%arg0: i32, %arg1: i32) -> (i32, i32) {
    %c0_i32 = arith.constant 0 : i32
    %c0_i32_0 = arith.constant 0 : i32
    %c0_i32_1 = arith.constant 0 : i32
    return %c0_i32, %c0_i32_0 : i32, i32
  }
  func.func @transform_10(%arg0: i32, %arg1: i32) -> (i32, i32) {
    %c0_i32 = arith.constant 0 : i32
    %c0_i32_0 = arith.constant 0 : i32
    %c0_i32_1 = arith.constant 0 : i32
    return %c0_i32, %c0_i32_0 : i32, i32
  }
  func.func @transform_11(%arg0: i32, %arg1: i32) -> (i32, i32) {
    %c0_i32 = arith.constant 0 : i32
    %c0_i32_0 = arith.constant 0 : i32
    %c0_i32_1 = arith.constant 0 : i32
    return %c0_i32, %c0_i32_0 : i32, i32
  }
  func.func @transform_12(%arg0: i32, %arg1: i32) -> (i32, i32) {
    %c0_i32 = arith.constant 0 : i32
    %c0_i32_0 = arith.constant 0 : i32
    %c0_i32_1 = arith.constant 0 : i32
    return %c0_i32, %c0_i32_0 : i32, i32
  }
  func.func @transform_13(%arg0: i32, %arg1: i32) -> (i32, i32) {
    %c0_i32 = arith.constant 0 : i32
    %c0_i32_0 = arith.constant 0 : i32
    %c0_i32_1 = arith.constant 0 : i32
    return %c0_i32, %c0_i32_0 : i32, i32
  }
  func.func @transform_14(%arg0: i32, %arg1: i32) -> (i32, i32) {
    %c0_i32 = arith.constant 0 : i32
    %c0_i32_0 = arith.constant 0 : i32
    %c0_i32_1 = arith.constant 0 : i32
    return %c0_i32, %c0_i32_0 : i32, i32
  }
  func.func @transform_15(%arg0: i32, %arg1: i32) -> (i32, i32) {
    %c0_i32 = arith.constant 0 : i32
    %c0_i32_0 = arith.constant 0 : i32
    %c0_i32_1 = arith.constant 0 : i32
    return %c0_i32, %c0_i32_0 : i32, i32
  }
  func.func @transform_16(%arg0: i32, %arg1: i32) -> (i32, i32) {
    %c0_i32 = arith.constant 0 : i32
    %c0_i32_0 = arith.constant 0 : i32
    %c0_i32_1 = arith.constant 0 : i32
    return %c0_i32, %c0_i32_0 : i32, i32
  }
  func.func @transform_17(%arg0: i32, %arg1: i32) -> (i32, i32, i32) {
    %c0_i32 = arith.constant 0 : i32
    %c0_i32_0 = arith.constant 0 : i32
    return %arg0, %arg1, %c0_i32 : i32, i32, i32
  }
}

</mosaic_0001>

<llo_original>
// kernel: tpu_custom_call.1
$region0: #{tpu_custom_call.1}
  #allocation0 [shape = 'u32[]', space=smem, size = 0x4, offset = 0x4, fixed_abs, tag = 'smem constant byte address 0x4 - core index']
  #allocation1 [shape = 'u32[72,128]{1,0:T(1,128)}', space=vmem, size = 0x9000, scoped, tag = 'internal scratch']
  #allocation2 [shape = 'bf16[8,8,4]{2,1,0:T(8,128)(2,1)}', space=vmem, size = 0x4000, scoped, tag = 'scratch operand']
  #allocation3 [shape = 'bf16[8,8,4]{2,1,0:T(8,128)(2,1)}', space=vmem, size = 0x4000, scoped, tag = 'scratch operand']
  %s0 = inlined_call_operand.vmem [shape: f32[2,8,32], index: 0, kind: input, shape index: {}]
  %s1 = inlined_call_operand.hbm [shape: bf16[2,8,32], index: 1, kind: input, shape index: {}]
  %s2 = inlined_call_operand.hbm [shape: s8[2,8,8], index: 2, kind: input, shape index: {}]
  %s3 = inlined_call_operand.vmem [shape: bf16[32,32], index: 3, kind: input, shape index: {}]
  %s4 = inlined_call_operand.vmem [shape: f32[1,32], index: 4, kind: input, shape index: {}]
  %s5 = inlined_call_operand.vmem [shape: bf16[32,64], index: 5, kind: input, shape index: {}]
  %s6 = inlined_call_operand.vmem [shape: f32[1,64], index: 6, kind: input, shape index: {}]
  %s7 = inlined_call_operand.hbm [shape: bf16[8,4,32], index: 7, kind: input, shape index: {}]
  %s8 = inlined_call_operand.vmem [shape: f32[1,32], index: 8, kind: input, shape index: {}]
  %s9 = inlined_call_operand.vmem [shape: f32[1,32], index: 9, kind: input, shape index: {}]
  %s10 = inlined_call_operand.vmem [shape: f32[1,32], index: 10, kind: input, shape index: {}]
  %s11 = inlined_call_operand.hbm [shape: bf16[32,64], index: 11, kind: input, shape index: {}]
  %s12 = inlined_call_operand.vmem [shape: f32[1,64], index: 12, kind: input, shape index: {}]
  %s13 = inlined_call_operand.vmem [shape: bf16[64,32], index: 13, kind: input, shape index: {}]
  %s14 = inlined_call_operand.vmem [shape: f32[1,32], index: 14, kind: input, shape index: {}]
  %s15 = inlined_call_operand.vmem [shape: f32[1,32], index: 15, kind: input, shape index: {}]
  %s16 = inlined_call_operand.vmem [shape: f32[1,32], index: 16, kind: input, shape index: {}]
  %s17 = inlined_call_operand.hbm [shape: f32[2,8,32], index: 17, kind: output, shape index: {}]
  %s18 = sld [smem:[#allocation0]]
  $region121: #{tpu_custom_call.1} parent=0
    _
  %s20 = ssub.s32 1, %s18
  %s21 = scalar_select 0, %s20, %s18
  $region1: #{tpu_custom_call.1} parent=0
    #allocation4 [shape = 'u8[4096]{0}', space=vmem, size = 0x1000, scoped, tag = 'input window, operand 1']
    #allocation5 [shape = 's32[2]{0}', space=sflag, size = 0x8, scoped, tag = 'scoped memory for tpu_custom_call.1']
    #allocation6 [shape = 's32[2]{0}', space=sflag, size = 0x8, scoped, tag = 'scoped memory for tpu_custom_call.1']
    #allocation7 [shape = 'u8[2048]{0}', space=vmem, size = 0x800, scoped, tag = 'input window, operand 2']
    #allocation8 [shape = 's32[2]{0}', space=sflag, size = 0x8, scoped, tag = 'scoped memory for tpu_custom_call.1']
    #allocation9 [shape = 'u8[8192]{0}', space=vmem, size = 0x2000, scoped, tag = 'input window, operand 7, single buffered']
    #allocation10 [shape = 'u8[8192]{0}', space=vmem, size = 0x2000, scoped, tag = 'input window, operand 11, single buffered']
    #allocation11 [shape = 's32[1]{0}', space=sflag, size = 0x4, scoped, tag = 'scoped memory for tpu_custom_call.1']
    #allocation12 [shape = 'u8[8192]{0}', space=vmem, size = 0x2000, scoped, tag = 'output window, operand 0']
    %22 = vsyncpa [#allocation5], 0
    %s23 = scalar_lea.sflag [#allocation5], 1
    %24 = vsyncpa %s23, 0
    %25 = vsyncpa [#allocation8], 0
    %s26 = scalar_lea.sflag [#allocation8], 1
    %27 = vsyncpa %s26, 0
    %28 = vsyncpa [#allocation11], 0
    %29 = vsyncpa [#allocation6], 0
    %s30 = scalar_lea.sflag [#allocation6], 1
    %31 = vsyncpa %s30, 0
    loop: start=0, step=1, limit=4
    $region2: #{tpu_custom_call.1} parent=1 // loop_pre_header
      _
    $region3: #{tpu_custom_call.1} parent=1 // loop_header
      %s33 = sphi 0, %s37
      %p34 = scmp.ge.s32.totalorder %s33, 4
      %s40 = sphi 0, %s52
      %s41 = sphi 0, %s48
      %s42 = sphi 0, %s40
      %s43 = sphi 0, %s41
      %s44 = sphi 0, %s42
      %s45 = sphi 0, %s43
      %s57 = sphi 0, %s59
      %s60 = sphi 0, %s57
      %s61 = sphi 0, %s60
      %s77 = sphi 0, %s61
      %s83 = sphi 0, %s85
      %s86 = sphi 0, %s83
      %s87 = sphi 0, %s86
      %s103 = sphi 0, %s87
      %s111 = sphi 0, %s113
      %s114 = sphi 0, %s111
      %s115 = sphi 0, %s114
      %s131 = sphi 0, %s115
      %s135 = sphi 0, %s135
      %s137 = sphi 0, %s135
      %s138 = sphi 0, %s137
      %s152 = sphi 0, %s138
      %s156 = sphi 0, %s156
      %s158 = sphi 0, %s156
      %s159 = sphi 0, %s158
      %s173 = sphi 0, %s159
      %s177 = sphi 0, %s177
      %s179 = sphi 0, %s177
      %s180 = sphi 0, %s179
      %s194 = sphi 0, %s180
      %s198 = sphi 0, %s198
      %s200 = sphi 0, %s198
      %s201 = sphi 0, %s200
      %s215 = sphi 0, %s201
      %s219 = sphi 0, %s219
      %s221 = sphi 0, %s219
      %s222 = sphi 0, %s221
      %s236 = sphi 0, %s222
      %s240 = sphi 0, %s240
      %s242 = sphi 0, %s240
      %s243 = sphi 0, %s242
      %s257 = sphi 0, %s243
      %s261 = sphi 0, %s261
      %s263 = sphi 0, %s261
      %s264 = sphi 0, %s263
      %s278 = sphi 0, %s264
      %s282 = sphi 0, %s282
      %s284 = sphi 0, %s282
      %s285 = sphi 0, %s284
      %s299 = sphi 0, %s285
      %s303 = sphi 0, %s303
      %s305 = sphi 0, %s303
      %s306 = sphi 0, %s305
      %s320 = sphi 0, %s306
      %s324 = sphi 0, %s324
      %s326 = sphi 0, %s324
      %s327 = sphi 0, %s326
      %s341 = sphi 0, %s327
      %s345 = sphi 0, %s345
      %s347 = sphi 0, %s345
      %s348 = sphi 0, %s347
      %s362 = sphi 0, %s348
      %s366 = sphi 0, %s366
      %s368 = sphi 0, %s366
      %s369 = sphi 0, %s368
      %s383 = sphi 0, %s369
      %s387 = sphi 0, %s387
      %s389 = sphi 0, %s387
      %s390 = sphi 0, %s389
      %s404 = sphi 0, %s390
      %s408 = sphi 0, %s408
      %s410 = sphi 0, %s408
      %s411 = sphi 0, %s410
      %s425 = sphi 0, %s411
      %s433 = sphi 0, %s435
      %s436 = sphi 0, %s433
      %s437 = sphi 0, %s436
      %s453 = sphi 0, %s437
    $region4: #{tpu_custom_call.1} parent=1 // loop_header_branch
      %36 = sbr.rel (%p34) target = $region8
    $region5: #{tpu_custom_call.1} parent=1 // loop_body
      %s38 = ssub.s32 %s33, 1
      %s39 = ssub.s32 %s33, 2
      %s46 = sadd.s32 1, %s41
      %p47 = scmp.ge.s32.totalorder %s46, 1
      %s48 = scalar_select %p47, 0, %s46
      %s49 = sadd.s32 1, %s40
      %s50 = scalar_select %p47, %s49, %s40
      %p51 = scmp.ge.s32.totalorder %s50, 2
      %s52 = scalar_select %p51, 0, %s50
      %s53 = ssub.s32 %s40, %s52
      %s54 = ssub.s32 %s41, %s48
      %s55 = sor.u32 %s53, %s54
      %p56 = scmp.eq.s32.totalorder %s55, 0
      %s58 = sadd.s32 %s57, 1
      %s59 = scalar_select %p56, %s57, %s58
      %p62 = pneg %p56
      %p63 = scmp.eq.s32.totalorder %s33, 1
      %p64 = por %p62, %p63
      %p65 = scmp.ne.s32.totalorder %s57, %s60
      %p66 = scmp.eq.s32.totalorder %s33, 0
      %p67 = por %p65, %p66
      %p68 = scmp.ne.s32.totalorder %s57, %s60
      %p69 = scmp.eq.s32.totalorder %s38, 1
      %p70 = por %p68, %p69
      %p71 = scmp.ne.s32.totalorder %s60, %s61
      %p72 = scmp.eq.s32.totalorder %s38, 0
      %p73 = por %p71, %p72
      %p74 = scmp.ne.s32.totalorder %s60, %s61
      %p75 = scmp.eq.s32.totalorder %s39, 1
      %p76 = por %p74, %p75
      %p78 = scmp.ne.s32.totalorder %s61, %s77
      %p79 = scmp.eq.s32.totalorder %s39, 0
      %p80 = por %p78, %p79
      %s81 = ssub.s32 %s40, %s52
      %p82 = scmp.eq.s32.totalorder %s81, 0
      %s84 = sadd.s32 %s83, 1
      %s85 = scalar_select %p82, %s83, %s84
      %p88 = pneg %p82
      %p89 = scmp.eq.s32.totalorder %s33, 1
      %p90 = por %p88, %p89
      %p91 = scmp.ne.s32.totalorder %s83, %s86
      %p92 = scmp.eq.s32.totalorder %s33, 0
      %p93 = por %p91, %p92
      %p94 = scmp.ne.s32.totalorder %s83, %s86
      %p95 = scmp.eq.s32.totalorder %s38, 1
      %p96 = por %p94, %p95
      %p97 = scmp.ne.s32.totalorder %s86, %s87
      %p98 = scmp.eq.s32.totalorder %s38, 0
      %p99 = por %p97, %p98
      %p100 = scmp.ne.s32.totalorder %s86, %s87
      %p101 = scmp.eq.s32.totalorder %s39, 1
      %p102 = por %p100, %p101
      %p104 = scmp.ne.s32.totalorder %s87, %s103
      %p105 = scmp.eq.s32.totalorder %s39, 0
      %p106 = por %p104, %p105
      %s107 = ssub.s32 %s40, %s52
      %s108 = ssub.s32 %s41, %s48
      %s109 = sor.u32 %s107, %s108
      %p110 = scmp.eq.s32.totalorder %s109, 0
      %s112 = sadd.s32 %s111, 1
      %s113 = scalar_select %p110, %s111, %s112
      %p116 = pneg %p110
      %p117 = scmp.eq.s32.totalorder %s33, 1
      %p118 = por %p116, %p117
      %p119 = scmp.ne.s32.totalorder %s111, %s114
      %p120 = scmp.eq.s32.totalorder %s33, 0
      %p121 = por %p119, %p120
      %p122 = scmp.ne.s32.totalorder %s111, %s114
      %p123 = scmp.eq.s32.totalorder %s38, 1
      %p124 = por %p122, %p123
      %p125 = scmp.ne.s32.totalorder %s114, %s115
      %p126 = scmp.eq.s32.totalorder %s38, 0
      %p127 = por %p125, %p126
      %p128 = scmp.ne.s32.totalorder %s114, %s115
      %p129 = scmp.eq.s32.totalorder %s39, 1
      %p130 = por %p128, %p129
      %p132 = scmp.ne.s32.totalorder %s115, %s131
      %p133 = scmp.eq.s32.totalorder %s39, 0
      %p134 = por %p132, %p133
      %s136 = sadd.s32 %s135, 1
      %p139 = scmp.eq.s32.totalorder %s33, 1
      %p140 = scmp.ne.s32.totalorder %s135, %s137
      %p141 = scmp.eq.s32.totalorder %s33, 0
      %p142 = por %p140, %p141
      %p143 = scmp.ne.s32.totalorder %s135, %s137
      %p144 = scmp.eq.s32.totalorder %s38, 1
      %p145 = por %p143, %p144
      %p146 = scmp.ne.s32.totalorder %s137, %s138
      %p147 = scmp.eq.s32.totalorder %s38, 0
      %p148 = por %p146, %p147
      %p149 = scmp.ne.s32.totalorder %s137, %s138
      %p150 = scmp.eq.s32.totalorder %s39, 1
      %p151 = por %p149, %p150
      %p153 = scmp.ne.s32.totalorder %s138, %s152
      %p154 = scmp.eq.s32.totalorder %s39, 0
      %p155 = por %p153, %p154
      %s157 = sadd.s32 %s156, 1
      %p160 = scmp.eq.s32.totalorder %s33, 1
      %p161 = scmp.ne.s32.totalorder %s156, %s158
      %p162 = scmp.eq.s32.totalorder %s33, 0
      %p163 = por %p161, %p162
      %p164 = scmp.ne.s32.totalorder %s156, %s158
      %p165 = scmp.eq.s32.totalorder %s38, 1
      %p166 = por %p164, %p165
      %p167 = scmp.ne.s32.totalorder %s158, %s159
      %p168 = scmp.eq.s32.totalorder %s38, 0
      %p169 = por %p167, %p168
      %p170 = scmp.ne.s32.totalorder %s158, %s159
      %p171 = scmp.eq.s32.totalorder %s39, 1
      %p172 = por %p170, %p171
      %p174 = scmp.ne.s32.totalorder %s159, %s173
      %p175 = scmp.eq.s32.totalorder %s39, 0
      %p176 = por %p174, %p175
      %s178 = sadd.s32 %s177, 1
      %p181 = scmp.eq.s32.totalorder %s33, 1
      %p182 = scmp.ne.s32.totalorder %s177, %s179
      %p183 = scmp.eq.s32.totalorder %s33, 0
      %p184 = por %p182, %p183
      %p185 = scmp.ne.s32.totalorder %s177, %s179
      %p186 = scmp.eq.s32.totalorder %s38, 1
      %p187 = por %p185, %p186
      %p188 = scmp.ne.s32.totalorder %s179, %s180
      %p189 = scmp.eq.s32.totalorder %s38, 0
      %p190 = por %p188, %p189
      %p191 = scmp.ne.s32.totalorder %s179, %s180
      %p192 = scmp.eq.s32.totalorder %s39, 1
      %p193 = por %p191, %p192
      %p195 = scmp.ne.s32.totalorder %s180, %s194
      %p196 = scmp.eq.s32.totalorder %s39, 0
      %p197 = por %p195, %p196
      %s199 = sadd.s32 %s198, 1
      %p202 = scmp.eq.s32.totalorder %s33, 1
      %p203 = scmp.ne.s32.totalorder %s198, %s200
      %p204 = scmp.eq.s32.totalorder %s33, 0
      %p205 = por %p203, %p204
      %p206 = scmp.ne.s32.totalorder %s198, %s200
      %p207 = scmp.eq.s32.totalorder %s38, 1
      %p208 = por %p206, %p207
      %p209 = scmp.ne.s32.totalorder %s200, %s201
      %p210 = scmp.eq.s32.totalorder %s38, 0
      %p211 = por %p209, %p210
      %p212 = scmp.ne.s32.totalorder %s200, %s201
      %p213 = scmp.eq.s32.totalorder %s39, 1
      %p214 = por %p212, %p213
      %p216 = scmp.ne.s32.totalorder %s201, %s215
      %p217 = scmp.eq.s32.totalorder %s39, 0
      %p218 = por %p216, %p217
      %s220 = sadd.s32 %s219, 1
      %p223 = scmp.eq.s32.totalorder %s33, 1
      %p224 = scmp.ne.s32.totalorder %s219, %s221
      %p225 = scmp.eq.s32.totalorder %s33, 0
      %p226 = por %p224, %p225
      %p227 = scmp.ne.s32.totalorder %s219, %s221
      %p228 = scmp.eq.s32.totalorder %s38, 1
      %p229 = por %p227, %p228
      %p230 = scmp.ne.s32.totalorder %s221, %s222
      %p231 = scmp.eq.s32.totalorder %s38, 0
      %p232 = por %p230, %p231
      %p233 = scmp.ne.s32.totalorder %s221, %s222
      %p234 = scmp.eq.s32.totalorder %s39, 1
      %p235 = por %p233, %p234
      %p237 = scmp.ne.s32.totalorder %s222, %s236
      %p238 = scmp.eq.s32.totalorder %s39, 0
      %p239 = por %p237, %p238
      %s241 = sadd.s32 %s240, 1
      %p244 = scmp.eq.s32.totalorder %s33, 1
      %p245 = scmp.ne.s32.totalorder %s240, %s242
      %p246 = scmp.eq.s32.totalorder %s33, 0
      %p247 = por %p245, %p246
      %p248 = scmp.ne.s32.totalorder %s240, %s242
      %p249 = scmp.eq.s32.totalorder %s38, 1
      %p250 = por %p248, %p249
      %p251 = scmp.ne.s32.totalorder %s242, %s243
      %p252 = scmp.eq.s32.totalorder %s38, 0
      %p253 = por %p251, %p252
      %p254 = scmp.ne.s32.totalorder %s242, %s243
      %p255 = scmp.eq.s32.totalorder %s39, 1
      %p256 = por %p254, %p255
      %p258 = scmp.ne.s32.totalorder %s243, %s257
      %p259 = scmp.eq.s32.totalorder %s39, 0
      %p260 = por %p258, %p259
      %s262 = sadd.s32 %s261, 1
      %p265 = scmp.eq.s32.totalorder %s33, 1
      %p266 = scmp.ne.s32.totalorder %s261, %s263
      %p267 = scmp.eq.s32.totalorder %s33, 0
      %p268 = por %p266, %p267
      %p269 = scmp.ne.s32.totalorder %s261, %s263
      %p270 = scmp.eq.s32.totalorder %s38, 1
      %p271 = por %p269, %p270
      %p272 = scmp.ne.s32.totalorder %s263, %s264
      %p273 = scmp.eq.s32.totalorder %s38, 0
      %p274 = por %p272, %p273
      %p275 = scmp.ne.s32.totalorder %s263, %s264
      %p276 = scmp.eq.s32.totalorder %s39, 1
      %p277 = por %p275, %p276
      %p279 = scmp.ne.s32.totalorder %s264, %s278
      %p280 = scmp.eq.s32.totalorder %s39, 0
      %p281 = por %p279, %p280
      %s283 = sadd.s32 %s282, 1
      %p286 = scmp.eq.s32.totalorder %s33, 1
      %p287 = scmp.ne.s32.totalorder %s282, %s284
      %p288 = scmp.eq.s32.totalorder %s33, 0
      %p289 = por %p287, %p288
      %p290 = scmp.ne.s32.totalorder %s282, %s284
      %p291 = scmp.eq.s32.totalorder %s38, 1
      %p292 = por %p290, %p291
      %p293 = scmp.ne.s32.totalorder %s284, %s285
      %p294 = scmp.eq.s32.totalorder %s38, 0
      %p295 = por %p293, %p294
      %p296 = scmp.ne.s32.totalorder %s284, %s285
      %p297 = scmp.eq.s32.totalorder %s39, 1
      %p298 = por %p296, %p297
      %p300 = scmp.ne.s32.totalorder %s285, %s299
      %p301 = scmp.eq.s32.totalorder %s39, 0
      %p302 = por %p300, %p301
      %s304 = sadd.s32 %s303, 1
      %p307 = scmp.eq.s32.totalorder %s33, 1
      %p308 = scmp.ne.s32.totalorder %s303, %s305
      %p309 = scmp.eq.s32.totalorder %s33, 0
      %p310 = por %p308, %p309
      %p311 = scmp.ne.s32.totalorder %s303, %s305
      %p312 = scmp.eq.s32.totalorder %s38, 1
      %p313 = por %p311, %p312
      %p314 = scmp.ne.s32.totalorder %s305, %s306
      %p315 = scmp.eq.s32.totalorder %s38, 0
      %p316 = por %p314, %p315
      %p317 = scmp.ne.s32.totalorder %s305, %s306
      %p318 = scmp.eq.s32.totalorder %s39, 1
      %p319 = por %p317, %p318
      %p321 = scmp.ne.s32.totalorder %s306, %s320
      %p322 = scmp.eq.s32.totalorder %s39, 0
      %p323 = por %p321, %p322
      %s325 = sadd.s32 %s324, 1
      %p328 = scmp.eq.s32.totalorder %s33, 1
      %p329 = scmp.ne.s32.totalorder %s324, %s326
      %p330 = scmp.eq.s32.totalorder %s33, 0
      %p331 = por %p329, %p330
      %p332 = scmp.ne.s32.totalorder %s324, %s326
      %p333 = scmp.eq.s32.totalorder %s38, 1
      %p334 = por %p332, %p333
      %p335 = scmp.ne.s32.totalorder %s326, %s327
      %p336 = scmp.eq.s32.totalorder %s38, 0
      %p337 = por %p335, %p336
      %p338 = scmp.ne.s32.totalorder %s326, %s327
      %p339 = scmp.eq.s32.totalorder %s39, 1
      %p340 = por %p338, %p339
      %p342 = scmp.ne.s32.totalorder %s327, %s341
      %p343 = scmp.eq.s32.totalorder %s39, 0
      %p344 = por %p342, %p343
      %s346 = sadd.s32 %s345, 1
      %p349 = scmp.eq.s32.totalorder %s33, 1
      %p350 = scmp.ne.s32.totalorder %s345, %s347
      %p351 = scmp.eq.s32.totalorder %s33, 0
      %p352 = por %p350, %p351
      %p353 = scmp.ne.s32.totalorder %s345, %s347
      %p354 = scmp.eq.s32.totalorder %s38, 1
      %p355 = por %p353, %p354
      %p356 = scmp.ne.s32.totalorder %s347, %s348
      %p357 = scmp.eq.s32.totalorder %s38, 0
      %p358 = por %p356, %p357
      %p359 = scmp.ne.s32.totalorder %s347, %s348
      %p360 = scmp.eq.s32.totalorder %s39, 1
      %p361 = por %p359, %p360
      %p363 = scmp.ne.s32.totalorder %s348, %s362
      %p364 = scmp.eq.s32.totalorder %s39, 0
      %p365 = por %p363, %p364
      %s367 = sadd.s32 %s366, 1
      %p370 = scmp.eq.s32.totalorder %s33, 1
      %p371 = scmp.ne.s32.totalorder %s366, %s368
      %p372 = scmp.eq.s32.totalorder %s33, 0
      %p373 = por %p371, %p372
      %p374 = scmp.ne.s32.totalorder %s366, %s368
      %p375 = scmp.eq.s32.totalorder %s38, 1
      %p376 = por %p374, %p375
      %p377 = scmp.ne.s32.totalorder %s368, %s369
      %p378 = scmp.eq.s32.totalorder %s38, 0
      %p379 = por %p377, %p378
      %p380 = scmp.ne.s32.totalorder %s368, %s369
      %p381 = scmp.eq.s32.totalorder %s39, 1
      %p382 = por %p380, %p381
      %p384 = scmp.ne.s32.totalorder %s369, %s383
      %p385 = scmp.eq.s32.totalorder %s39, 0
      %p386 = por %p384, %p385
      %s388 = sadd.s32 %s387, 1
      %p391 = scmp.eq.s32.totalorder %s33, 1
      %p392 = scmp.ne.s32.totalorder %s387, %s389
      %p393 = scmp.eq.s32.totalorder %s33, 0
      %p394 = por %p392, %p393
      %p395 = scmp.ne.s32.totalorder %s387, %s389
      %p396 = scmp.eq.s32.totalorder %s38, 1
      %p397 = por %p395, %p396
      %p398 = scmp.ne.s32.totalorder %s389, %s390
      %p399 = scmp.eq.s32.totalorder %s38, 0
      %p400 = por %p398, %p399
      %p401 = scmp.ne.s32.totalorder %s389, %s390
      %p402 = scmp.eq.s32.totalorder %s39, 1
      %p403 = por %p401, %p402
      %p405 = scmp.ne.s32.totalorder %s390, %s404
      %p406 = scmp.eq.s32.totalorder %s39, 0
      %p407 = por %p405, %p406
      %s409 = sadd.s32 %s408, 1
      %p412 = scmp.eq.s32.totalorder %s33, 1
      %p413 = scmp.ne.s32.totalorder %s408, %s410
      %p414 = scmp.eq.s32.totalorder %s33, 0
      %p415 = por %p413, %p414
      %p416 = scmp.ne.s32.totalorder %s408, %s410
      %p417 = scmp.eq.s32.totalorder %s38, 1
      %p418 = por %p416, %p417
      %p419 = scmp.ne.s32.totalorder %s410, %s411
      %p420 = scmp.eq.s32.totalorder %s38, 0
      %p421 = por %p419, %p420
      %p422 = scmp.ne.s32.totalorder %s410, %s411
      %p423 = scmp.eq.s32.totalorder %s39, 1
      %p424 = por %p422, %p423
      %p426 = scmp.ne.s32.totalorder %s411, %s425
      %p427 = scmp.eq.s32.totalorder %s39, 0
      %p428 = por %p426, %p427
      %s429 = ssub.s32 %s40, %s52
      %s430 = ssub.s32 %s41, %s48
      %s431 = sor.u32 %s429, %s430
      %p432 = scmp.eq.s32.totalorder %s431, 0
      %s434 = sadd.s32 %s433, 1
      %s435 = scalar_select %p432, %s433, %s434
      %p438 = pneg %p432
      %p439 = scmp.eq.s32.totalorder %s33, 1
      %p440 = por %p438, %p439
      %p441 = scmp.ne.s32.totalorder %s433, %s436
      %p442 = scmp.eq.s32.totalorder %s33, 0
      %p443 = por %p441, %p442
      %p444 = scmp.ne.s32.totalorder %s433, %s436
      %p445 = scmp.eq.s32.totalorder %s38, 1
      %p446 = por %p444, %p445
      %p447 = scmp.ne.s32.totalorder %s436, %s437
      %p448 = scmp.eq.s32.totalorder %s38, 0
      %p449 = por %p447, %p448
      %p450 = scmp.ne.s32.totalorder %s436, %s437
      %p451 = scmp.eq.s32.totalorder %s39, 1
      %p452 = por %p450, %p451
      %p454 = scmp.ne.s32.totalorder %s437, %s453
      %p455 = scmp.eq.s32.totalorder %s39, 0
      %p456 = por %p454, %p455
      %p457 = scmp.le.s32.totalorder 1, %s33
      %p458 = scmp.lt.s32.totalorder %s33, 3
      %p459 = pnand %p457, %p458
      %p460 = pneg %p459
      // Predicated region
      $region9: #{tpu_custom_call.1} parent=5 // pred_check
        _
      $region10: #{tpu_custom_call.1} parent=5 // pred_check_branch
        %462 = sbr.rel (%p459) target = $region12
      $region11: #{tpu_custom_call.1} parent=5 // pred_region
        %s463 = ssub.s32 %s33, 1
        // Predicated region
        $region13: #{tpu_custom_call.1} parent=11 // pred_check
          %p464 = pneg %p148
        $region14: #{tpu_custom_call.1} parent=11 // pred_check_branch
          %466 = sbr.rel (%p464) target = $region16
        $region15: #{tpu_custom_call.1} parent=11 // pred_region
          _
        $region16: #{tpu_custom_call.1} parent=11 // pred_fallthru
          _
        // Predicated region
        $region17: #{tpu_custom_call.1} parent=11 // pred_check
          %p467 = pneg %p169
        $region18: #{tpu_custom_call.1} parent=11 // pred_check_branch
          %469 = sbr.rel (%p467) target = $region20
        $region19: #{tpu_custom_call.1} parent=11 // pred_region
          _
        $region20: #{tpu_custom_call.1} parent=11 // pred_fallthru
          _
        // Predicated region
        $region21: #{tpu_custom_call.1} parent=11 // pred_check
          %p470 = pneg %p190
        $region22: #{tpu_custom_call.1} parent=11 // pred_check_branch
          %472 = sbr.rel (%p470) target = $region24
        $region23: #{tpu_custom_call.1} parent=11 // pred_region
          _
        $region24: #{tpu_custom_call.1} parent=11 // pred_fallthru
          _
        // Predicated region
        $region25: #{tpu_custom_call.1} parent=11 // pred_check
          %p473 = pneg %p211
        $region26: #{tpu_custom_call.1} parent=11 // pred_check_branch
          %475 = sbr.rel (%p473) target = $region28
        $region27: #{tpu_custom_call.1} parent=11 // pred_region
          _
        $region28: #{tpu_custom_call.1} parent=11 // pred_fallthru
          _
        // Predicated region
        $region29: #{tpu_custom_call.1} parent=11 // pred_check
          %p476 = pneg %p232
        $region30: #{tpu_custom_call.1} parent=11 // pred_check_branch
          %478 = sbr.rel (%p476) target = $region32
        $region31: #{tpu_custom_call.1} parent=11 // pred_region
          %480 = vsyncadd [#allocation8], 0
          %s481 = sshll.u32 %s7, 4
          %s482 = int_to_ptr.hbm [resolvable:$true] %s481
          %s483 = sshll.u32 [#allocation9], 4
          %s484 = int_to_ptr.vmem [resolvable:$true] %s483
          %489 = dma.hbm_to_vmem [thread:$0]  %s482, 256, %s484, [#allocation8], 32, 32, 2
        $region32: #{tpu_custom_call.1} parent=11 // pred_fallthru
          _
        // Predicated region
        $region33: #{tpu_custom_call.1} parent=11 // pred_check
          %p490 = pneg %p253
        $region34: #{tpu_custom_call.1} parent=11 // pred_check_branch
          %492 = sbr.rel (%p490) target = $region36
        $region35: #{tpu_custom_call.1} parent=11 // pred_region
          _
        $region36: #{tpu_custom_call.1} parent=11 // pred_fallthru
          _
        // Predicated region
        $region37: #{tpu_custom_call.1} parent=11 // pred_check
          %p493 = pneg %p274
        $region38: #{tpu_custom_call.1} parent=11 // pred_check_branch
          %495 = sbr.rel (%p493) target = $region40
        $region39: #{tpu_custom_call.1} parent=11 // pred_region
          _
        $region40: #{tpu_custom_call.1} parent=11 // pred_fallthru
          _
        // Predicated region
        $region41: #{tpu_custom_call.1} parent=11 // pred_check
          %p496 = pneg %p295
        $region42: #{tpu_custom_call.1} parent=11 // pred_check_branch
          %498 = sbr.rel (%p496) target = $region44
        $region43: #{tpu_custom_call.1} parent=11 // pred_region
          _
        $region44: #{tpu_custom_call.1} parent=11 // pred_fallthru
          _
        // Predicated region
        $region45: #{tpu_custom_call.1} parent=11 // pred_check
          %p499 = pneg %p316
        $region46: #{tpu_custom_call.1} parent=11 // pred_check_branch
          %501 = sbr.rel (%p499) target = $region48
        $region47: #{tpu_custom_call.1} parent=11 // pred_region
          %503 = vsyncadd [#allocation11], 0
          %s504 = sshll.u32 %s11, 4
          %s505 = int_to_ptr.hbm [resolvable:$true] %s504
          %s506 = sshll.u32 [#allocation10], 4
          %s507 = int_to_ptr.vmem [resolvable:$true] %s506
          %512 = dma.hbm_to_vmem [thread:$0]  %s505, 256, %s507, [#allocation11], 64, 64, 4
        $region48: #{tpu_custom_call.1} parent=11 // pred_fallthru
          _
        // Predicated region
        $region49: #{tpu_custom_call.1} parent=11 // pred_check
          %p513 = pneg %p337
        $region50: #{tpu_custom_call.1} parent=11 // pred_check_branch
          %515 = sbr.rel (%p513) target = $region52
        $region51: #{tpu_custom_call.1} parent=11 // pred_region
          _
        $region52: #{tpu_custom_call.1} parent=11 // pred_fallthru
          _
        // Predicated region
        $region53: #{tpu_custom_call.1} parent=11 // pred_check
          %p516 = pneg %p358
        $region54: #{tpu_custom_call.1} parent=11 // pred_check_branch
          %518 = sbr.rel (%p516) target = $region56
        $region55: #{tpu_custom_call.1} parent=11 // pred_region
          _
        $region56: #{tpu_custom_call.1} parent=11 // pred_fallthru
          _
        // Predicated region
        $region57: #{tpu_custom_call.1} parent=11 // pred_check
          %p519 = pneg %p379
        $region58: #{tpu_custom_call.1} parent=11 // pred_check_branch
          %521 = sbr.rel (%p519) target = $region60
        $region59: #{tpu_custom_call.1} parent=11 // pred_region
          _
        $region60: #{tpu_custom_call.1} parent=11 // pred_fallthru
          _
        // Predicated region
        $region61: #{tpu_custom_call.1} parent=11 // pred_check
          %p522 = pneg %p400
        $region62: #{tpu_custom_call.1} parent=11 // pred_check_branch
          %524 = sbr.rel (%p522) target = $region64
        $region63: #{tpu_custom_call.1} parent=11 // pred_region
          _
        $region64: #{tpu_custom_call.1} parent=11 // pred_fallthru
          _
        // Predicated region
        $region65: #{tpu_custom_call.1} parent=11 // pred_check
          %p525 = pneg %p421
        $region66: #{tpu_custom_call.1} parent=11 // pred_check_branch
          %527 = sbr.rel (%p525) target = $region68
        $region67: #{tpu_custom_call.1} parent=11 // pred_region
          _
        $region68: #{tpu_custom_call.1} parent=11 // pred_fallthru
          _
      $region12: #{tpu_custom_call.1} parent=5 // pred_fallthru
        _
      %p528 = scmp.lt.s32.totalorder %s33, 2
      // Predicated region
      $region69: #{tpu_custom_call.1} parent=5 // pred_check
        %p529 = pneg %p528
      $region70: #{tpu_custom_call.1} parent=5 // pred_check_branch
        %531 = sbr.rel (%p529) target = $region72
      $region71: #{tpu_custom_call.1} parent=5 // pred_region
        // Predicated region
        $region73: #{tpu_custom_call.1} parent=71 // pred_check
          %p532 = pneg %p67
        $region74: #{tpu_custom_call.1} parent=71 // pred_check_branch
          %534 = sbr.rel (%p532) target = $region76
        $region75: #{tpu_custom_call.1} parent=71 // pred_region
          %p535 = scmp.lt.s32.totalorder %s40, 1
          %s536 = scalar_select %p535, %s40, 1
          %p537 = scmp.lt.s32.totalorder %s41, 0
          %s538 = scalar_select %p537, %s41, 0
          %s539 = sadd.s32 %s538, %s536
          %s540 = smul.addr %s539, 8
          %s541 = scalar_lea.vmem %s0, %s540
        $region76: #{tpu_custom_call.1} parent=71 // pred_fallthru
          _
        // Predicated region
        $region77: #{tpu_custom_call.1} parent=71 // pred_check
          %p542 = pneg %p93
        $region78: #{tpu_custom_call.1} parent=71 // pred_check_branch
          %544 = sbr.rel (%p542) target = $region80
        $region79: #{tpu_custom_call.1} parent=71 // pred_region
          %s545 = sand.u32 %s83, 1
          %s546 = scalar_lea.sflag [#allocation5], %s545
          %s547 = sand.u32 %s83, 1
          %s548 = smul.addr %s547, 4
          %s549 = scalar_lea.vmem [#allocation4], %s548
          %551 = vsyncadd %s546, 0
          %s552 = smul.addr %s40, 4
          %s553 = scalar_lea.hbm %s1, %s552
          %s555 = sshll.u32 %s553, 4
          %s556 = int_to_ptr.hbm [resolvable:$true] %s555
          %s557 = sshll.u32 %s549, 4
          %s558 = int_to_ptr.vmem [resolvable:$true] %s557
          %560 = dma.hbm_to_vmem [thread:$0]  %s556, 64, %s558, %s546
        $region80: #{tpu_custom_call.1} parent=71 // pred_fallthru
          _
        // Predicated region
        $region81: #{tpu_custom_call.1} parent=71 // pred_check
          %p561 = pneg %p121
        $region82: #{tpu_custom_call.1} parent=71 // pred_check_branch
          %563 = sbr.rel (%p561) target = $region84
        $region83: #{tpu_custom_call.1} parent=71 // pred_region
          %s564 = sand.u32 %s33, 1
          %s565 = scalar_lea.sflag [#allocation8], %s564
          %s566 = sand.u32 %s111, 1
          %s567 = smul.addr %s566, 2
          %s568 = scalar_lea.vmem [#allocation7], %s567
          %570 = vsyncadd %s565, 0
          %s571 = sadd.s32 %s41, %s40
          %s572 = smul.addr %s571, 2
          %s573 = scalar_lea.hbm %s2, %s572
          %s575 = sshll.u32 %s573, 4
          %s576 = int_to_ptr.hbm [resolvable:$true] %s575
          %s577 = sshll.u32 %s568, 4
          %s578 = int_to_ptr.vmem [resolvable:$true] %s577
          %580 = dma.hbm_to_vmem [thread:$0]  %s576, 32, %s578, %s565
        $region84: #{tpu_custom_call.1} parent=71 // pred_fallthru
          _
      $region72: #{tpu_custom_call.1} parent=5 // pred_fallthru
        _
      %p581 = scmp.le.s32.totalorder 1, %s33
      %p582 = scmp.lt.s32.totalorder %s33, 3
      %p583 = pnand %p581, %p582
      %p584 = pneg %p583
      // Predicated region
      $region85: #{tpu_custom_call.1} parent=5 // pred_check
        _
      $region86: #{tpu_custom_call.1} parent=5 // pred_check_branch
        %586 = sbr.rel (%p583) target = $region88
      $region87: #{tpu_custom_call.1} parent=5 // pred_region
        %s587 = ssub.s32 %s33, 1
        %s588 = sand.u32 %s86, 1
        %s589 = scalar_lea.sflag [#allocation5], %s588
        %s590 = sand.u32 %s86, 1
        %s591 = smul.addr %s590, 4
        %s592 = scalar_lea.vmem [#allocation4], %s591
        // Predicated region
        $region89: #{tpu_custom_call.1} parent=87 // pred_check
          %p593 = pneg %p99
        $region90: #{tpu_custom_call.1} parent=87 // pred_check_branch
          %595 = sbr.rel (%p593) target = $region92
        $region91: #{tpu_custom_call.1} parent=87 // pred_region
          %597 = dma.done %s589, 64
        $region92: #{tpu_custom_call.1} parent=87 // pred_fallthru
          _
        %s598 = sand.u32 %s38, 1
        %s599 = scalar_lea.sflag [#allocation8], %s598
        %s600 = sand.u32 %s114, 1
        %s601 = smul.addr %s600, 2
        %s602 = scalar_lea.vmem [#allocation7], %s601
        // Predicated region
        $region93: #{tpu_custom_call.1} parent=87 // pred_check
          %p603 = pneg %p127
        $region94: #{tpu_custom_call.1} parent=87 // pred_check_branch
          %605 = sbr.rel (%p603) target = $region96
        $region95: #{tpu_custom_call.1} parent=87 // pred_region
          %607 = dma.done %s599, 32
        $region96: #{tpu_custom_call.1} parent=87 // pred_fallthru
          _
        // Predicated region
        $region97: #{tpu_custom_call.1} parent=87 // pred_check
          %p608 = pneg %p232
        $region98: #{tpu_custom_call.1} parent=87 // pred_check_branch
          %610 = sbr.rel (%p608) target = $region100
        $region99: #{tpu_custom_call.1} parent=87 // pred_region
          %612 = dma.done [#allocation8], 256
        $region100: #{tpu_custom_call.1} parent=87 // pred_fallthru
          _
        // Predicated region
        $region101: #{tpu_custom_call.1} parent=87 // pred_check
          %p613 = pneg %p316
        $region102: #{tpu_custom_call.1} parent=87 // pred_check_branch
          %615 = sbr.rel (%p613) target = $region104
        $region103: #{tpu_custom_call.1} parent=87 // pred_region
          %617 = dma.done [#allocation11], 256
        $region104: #{tpu_custom_call.1} parent=87 // pred_fallthru
          _
        %p618 = scmp.lt.s32.totalorder %s42, 1
        %s619 = scalar_select %p618, %s42, 1
        %p620 = scmp.lt.s32.totalorder %s43, 0
        %s621 = scalar_select %p620, %s43, 0
        %s622 = sadd.s32 %s621, %s619
        %s623 = smul.addr %s622, 8
        %s624 = scalar_lea.vmem %s0, %s623
        %p625 = pneg %p73
        %p626 = pneg %p70
        %s627 = sand.u32 %s86, 1
        %s628 = scalar_lea.sflag [#allocation5], %s627
        %s629 = sand.u32 %s86, 1
        %s630 = smul.addr %s629, 4
        %s631 = scalar_lea.vmem [#allocation4], %s630
        %p632 = pneg %p99
        %p633 = pneg %p96
        %s634 = sand.u32 %s38, 1
        %s635 = scalar_lea.sflag [#allocation8], %s634
        %s636 = sand.u32 %s114, 1
        %s637 = smul.addr %s636, 2
        %s638 = scalar_lea.vmem [#allocation7], %s637
        %p639 = pneg %p127
        %p640 = pneg %p124
        %p641 = pneg %p148
        %p642 = pneg %p145
        %p643 = pneg %p169
        %p644 = pneg %p166
        %p645 = pneg %p190
        %p646 = pneg %p187
        %p647 = pneg %p211
        %p648 = pneg %p208
        %p649 = pneg %p232
        %p650 = pneg %p229
        %p651 = pneg %p253
        %p652 = pneg %p250
        %p653 = pneg %p274
        %p654 = pneg %p271
        %p655 = pneg %p295
        %p656 = pneg %p292
        %p657 = pneg %p316
        %p658 = pneg %p313
        %p659 = pneg %p337
        %p660 = pneg %p334
        %p661 = pneg %p358
        %p662 = pneg %p355
        %p663 = pneg %p379
        %p664 = pneg %p376
        %p665 = pneg %p400
        %p666 = pneg %p397
        %p667 = pneg %p421
        %p668 = pneg %p418
        %p669 = pneg %p449
        %p670 = pneg %p446
        %s671 = sand.u32 %s436, 1
        %s672 = scalar_lea.sflag [#allocation6], %s671
        %s673 = sand.u32 %s436, 1
        %s674 = smul.addr %s673, 8
        %s675 = scalar_lea.vmem [#allocation12], %s674
        %p676 = scmp.lt.s32.totalorder %s42, 1
        %s677 = scalar_select %p676, %s42, 1
        %p678 = scmp.lt.s32.totalorder %s43, 0
        %s679 = scalar_select %p678, %s43, 0
        %s680 = sadd.s32 %s679, %s677
        %s681 = smul.addr %s680, 8
        %s682 = scalar_lea.vmem %s0, %s681
        %v686 = vld [vmem:[%s682] sm:$0xff]
        %p687 = scmp.eq.s32.totalorder %s43, 0
        // Predicated region
        $region105: #{tpu_custom_call.1} parent=87 // pred_check
          %p688 = pneg %p687
        $region106: #{tpu_custom_call.1} parent=87 // pred_check_branch
          %690 = sbr.rel (%p688) target = $region108
        $region107: #{tpu_custom_call.1} parent=87 // pred_region
          %v691 = vld [vmem:[%s592] sm:$0xf]
          %v692 = vld [vmem:[%s5] sm:$0xf]
          %v693 = vld [vmem:[%s5 + $0x4] sm:$0xf]
          %v694 = vld [vmem:[%s5 + $0x8] sm:$0xf]
          %v695 = vld [vmem:[%s5 + $0xc] sm:$0xf]
          %v696 = vld [vmem:[%s6] sm:$0x1]
          %v698 = vperm.slane %v696, 0
          %v704 = vunpack.c.l.b16 %v692
          %v705 = vunpack.c.l.b16 %v693
          %v706 = vunpack.c.l.b16 %v694
          %v707 = vunpack.c.l.b16 %v695
          %v708 = vpack.c.b16 %v705, %v704
          %v709 = vpack.c.b16 %v707, %v706
          %vm712 = vcmask 261120
          %v714 = vsel %vm712, %v691, 0
          %716 = vmatpush.bf16.msra.mxu0 0
          %717 = vmatpush.bf16.msra.mxu0 0
          %718 = vmatpush.bf16.msra.mxu0 0
          %719 = vmatpush.bf16.msra.mxu0 0
          %720 = vmatpush.bf16.msra.mxu0 0
          %721 = vmatpush.bf16.msra.mxu0 0
          %722 = vmatpush.bf16.msra.mxu0 %v709
          %723 = vmatpush.bf16.msra.mxu0 %v708
          %724 = vmatmul.bf16.gmra.mxu0 %v714
          %v725 = vpop.f32.mrf.mxu0
          %v726 = vadd.f32 %v698, %v725
          %v727 = vpop.f32.mrf.mxu0
          %728 = vdwg.mxu0
          %v729 = vpack.c.bf16 %v726, %v726
          %vm730 = vcmask 27648
          %731 = vst.msk [vmem:[#allocation2] sm:$0xf] %vm730, %v729
          %733 = vrot.lane.b32.xlu0 %v729, 96
          %v734 = vpop.permute.xlu0 %733
          %736 = vst.msk [vmem:[#allocation3] sm:$0xf] %vm730, %v734
          %737 = vrot.lane.b32.xlu0 %v729, 124
          %v738 = vpop.permute.xlu0 %737
          %s740 = scalar_lea.vmem [#allocation2], 4
          %741 = vst.msk [vmem:[%s740] sm:$0xf] %vm730, %v738
          %742 = vrot.lane.b32.xlu0 %v729, 92
          %v743 = vpop.permute.xlu0 %742
          %s745 = scalar_lea.vmem [#allocation3], 4
          %746 = vst.msk [vmem:[%s745] sm:$0xf] %vm730, %v743
          %747 = vrot.lane.b32.xlu0 %v729, 120
          %v748 = vpop.permute.xlu0 %747
          %s750 = scalar_lea.vmem [#allocation2], 8
          %751 = vst.msk [vmem:[%s750] sm:$0xf] %vm730, %v748
          %752 = vrot.lane.b32.xlu0 %v729, 88
          %v753 = vpop.permute.xlu0 %752
          %s755 = scalar_lea.vmem [#allocation3], 8
          %756 = vst.msk [vmem:[%s755] sm:$0xf] %vm730, %v753
          %757 = vrot.lane.b32.xlu0 %v729, 116
          %v758 = vpop.permute.xlu0 %757
          %s760 = scalar_lea.vmem [#allocation2], 12
          %761 = vst.msk [vmem:[%s760] sm:$0xf] %vm730, %v758
          %762 = vrot.lane.b32.xlu0 %v729, 84
          %v763 = vpop.permute.xlu0 %762
          %s765 = scalar_lea.vmem [#allocation3], 12
          %766 = vst.msk [vmem:[%s765] sm:$0xf] %vm730, %v763
          %767 = vrot.lane.b32.xlu0 %v729, 112
          %v768 = vpop.permute.xlu0 %767
          %s770 = scalar_lea.vmem [#allocation2], 16
          %771 = vst.msk [vmem:[%s770] sm:$0xf] %vm730, %v768
          %772 = vrot.lane.b32.xlu0 %v729, 80
          %v773 = vpop.permute.xlu0 %772
          %s775 = scalar_lea.vmem [#allocation3], 16
          %776 = vst.msk [vmem:[%s775] sm:$0xf] %vm730, %v773
          %777 = vrot.lane.b32.xlu0 %v729, 108
          %v778 = vpop.permute.xlu0 %777
          %s780 = scalar_lea.vmem [#allocation2], 20
          %781 = vst.msk [vmem:[%s780] sm:$0xf] %vm730, %v778
          %782 = vrot.lane.b32.xlu0 %v729, 76
          %v783 = vpop.permute.xlu0 %782
          %s785 = scalar_lea.vmem [#allocation3], 20
          %786 = vst.msk [vmem:[%s785] sm:$0xf] %vm730, %v783
          %787 = vrot.lane.b32.xlu0 %v729, 104
          %v788 = vpop.permute.xlu0 %787
          %s790 = scalar_lea.vmem [#allocation2], 24
          %791 = vst.msk [vmem:[%s790] sm:$0xf] %vm730, %v788
          %792 = vrot.lane.b32.xlu0 %v729, 72
          %v793 = vpop.permute.xlu0 %792
          %s795 = scalar_lea.vmem [#allocation3], 24
          %796 = vst.msk [vmem:[%s795] sm:$0xf] %vm730, %v793
          %797 = vrot.lane.b32.xlu0 %v729, 100
          %v798 = vpop.permute.xlu0 %797
          %s800 = scalar_lea.vmem [#allocation2], 28
          %801 = vst.msk [vmem:[%s800] sm:$0xf] %vm730, %v798
          %802 = vrot.lane.b32.xlu0 %v729, 68
          %v803 = vpop.permute.xlu0 %802
          %s805 = scalar_lea.vmem [#allocation3], 28
          %806 = vst.msk [vmem:[%s805] sm:$0xf] %vm730, %v803
        $region108: #{tpu_custom_call.1} parent=87 // pred_fallthru
          _
        %v807 = vpack.c.bf16 %v686, %v686
        %v808 = vld [vmem:[%s3] sm:$0xf]
        %v809 = vld [vmem:[%s3 + $0x4] sm:$0xf]
        %v810 = vld [vmem:[%s3 + $0x8] sm:$0xf]
        %v811 = vld [vmem:[%s3 + $0xc] sm:$0xf]
        %v812 = vld [vmem:[%s4] sm:$0x1]
        %v814 = vperm.slane %v812, 0
        %v820 = vunpack.c.l.b16 %v808
        %v821 = vunpack.c.l.b16 %v809
        %v822 = vunpack.c.l.b16 %v810
        %v823 = vunpack.c.l.b16 %v811
        %v824 = vpack.c.b16 %v821, %v820
        %v825 = vpack.c.b16 %v823, %v822
        %vm828 = vcmask 261120
        %v830 = vsel %vm828, %v807, 0
        %832 = vmatpush.bf16.msra.mxu0 0
        %833 = vmatpush.bf16.msra.mxu0 0
        %834 = vmatpush.bf16.msra.mxu0 0
        %835 = vmatpush.bf16.msra.mxu0 0
        %836 = vmatpush.bf16.msra.mxu0 0
        %837 = vmatpush.bf16.msra.mxu0 0
        %838 = vmatpush.bf16.msra.mxu0 %v825
        %839 = vmatpush.bf16.msra.mxu0 %v824
        %840 = vmatmul.bf16.gmra.mxu0 %v830
        %v841 = vpop.f32.mrf.mxu0
        %v842 = vadd.f32 %v814, %v841
        %v843 = vpop.f32.mrf.mxu0
        %844 = vdwg.mxu0
        %v845 = vpack.c.bf16 %v842, %v842
        %847 = vrot.lane.b32.xlu0 %v845, 124
        %v848 = vpop.permute.xlu0 %847
        %849 = vrot.lane.b32.xlu0 %v845, 120
        %v850 = vpop.permute.xlu0 %849
        %851 = vrot.lane.b32.xlu0 %v845, 116
        %v852 = vpop.permute.xlu0 %851
        %853 = vrot.lane.b32.xlu0 %v845, 112
        %v854 = vpop.permute.xlu0 %853
        %855 = vrot.lane.b32.xlu0 %v845, 108
        %v856 = vpop.permute.xlu0 %855
        %857 = vrot.lane.b32.xlu0 %v845, 104
        %v858 = vpop.permute.xlu0 %857
        %859 = vrot.lane.b32.xlu0 %v845, 100
        %v860 = vpop.permute.xlu0 %859
        %v861 = vld [vmem:[#allocation2] sm:$0xf]
        %v862 = vld [vmem:[#allocation2 + $0x4] sm:$0xf]
        %v863 = vld [vmem:[#allocation2 + $0x8] sm:$0xf]
        %v864 = vld [vmem:[#allocation2 + $0xc] sm:$0xf]
        %v865 = vld [vmem:[#allocation2 + $0x10] sm:$0xf]
        %v866 = vld [vmem:[#allocation2 + $0x14] sm:$0xf]
        %v867 = vld [vmem:[#allocation2 + $0x18] sm:$0xf]
        %v868 = vld [vmem:[#allocation2 + $0x1c] sm:$0xf]
        %v869 = vld [vmem:[#allocation3] sm:$0xf]
        %v870 = vld [vmem:[#allocation3 + $0x4] sm:$0xf]
        %v871 = vld [vmem:[#allocation3 + $0x8] sm:$0xf]
        %v872 = vld [vmem:[#allocation3 + $0xc] sm:$0xf]
        %v873 = vld [vmem:[#allocation3 + $0x10] sm:$0xf]
        %v874 = vld [vmem:[#allocation3 + $0x14] sm:$0xf]
        %v875 = vld [vmem:[#allocation3 + $0x18] sm:$0xf]
        %v876 = vld [vmem:[#allocation3 + $0x1c] sm:$0xf]
        %v877 = vld [vmem:[%s602] sm:$0x3]
        %vm878 = vcmask 31744
        %v880 = vsel %vm878, %v845, 0
        %v883 = vsel %vm878, %v861, 0
        %885 = vmatpush.bf16.xpose.msra.mxu0 0
        %886 = vmatpush.bf16.xpose.msra.mxu0 0
        %887 = vmatpush.bf16.xpose.msra.mxu0 0
        %888 = vmatpush.bf16.xpose.msra.mxu0 0
        %889 = vmatpush.bf16.xpose.msra.mxu0 0
        %890 = vmatpush.bf16.xpose.msra.mxu0 0
        %891 = vmatpush.bf16.xpose.msra.mxu0 0
        %892 = vmatpush.bf16.xpose.msra.mxu0 %v883
        %893 = vmatmul.bf16.gmra.mxu0 %v880
        %v894 = vpop.f32.mrf.mxu0
        %v895 = vadd.f32 0.0, %v894
        %v896 = vpop.f32.mrf.mxu0
        %897 = vdwg.mxu0
        %v899 = vsel %vm878, %v848, 0
        %v902 = vsel %vm878, %v862, 0
        %904 = vmatpush.bf16.xpose.msra.mxu0 0
        %905 = vmatpush.bf16.xpose.msra.mxu0 0
        %906 = vmatpush.bf16.xpose.msra.mxu0 0
        %907 = vmatpush.bf16.xpose.msra.mxu0 0
        %908 = vmatpush.bf16.xpose.msra.mxu0 0
        %909 = vmatpush.bf16.xpose.msra.mxu0 0
        %910 = vmatpush.bf16.xpose.msra.mxu0 0
        %911 = vmatpush.bf16.xpose.msra.mxu0 %v902
        %912 = vmatmul.bf16.gmra.mxu0 %v899
        %v913 = vpop.f32.mrf.mxu0
        %v914 = vadd.f32 0.0, %v913
        %v915 = vpop.f32.mrf.mxu0
        %916 = vdwg.mxu0
        %v918 = vsel %vm878, %v850, 0
        %v921 = vsel %vm878, %v863, 0
        %923 = vmatpush.bf16.xpose.msra.mxu0 0
        %924 = vmatpush.bf16.xpose.msra.mxu0 0
        %925 = vmatpush.bf16.xpose.msra.mxu0 0
        %926 = vmatpush.bf16.xpose.msra.mxu0 0
        %927 = vmatpush.bf16.xpose.msra.mxu0 0
        %928 = vmatpush.bf16.xpose.msra.mxu0 0
        %929 = vmatpush.bf16.xpose.msra.mxu0 0
        %930 = vmatpush.bf16.xpose.msra.mxu0 %v921
        %931 = vmatmul.bf16.gmra.mxu0 %v918
        %v932 = vpop.f32.mrf.mxu0
        %v933 = vadd.f32 0.0, %v932
        %v934 = vpop.f32.mrf.mxu0
        %935 = vdwg.mxu0
        %v937 = vsel %vm878, %v852, 0
        %v940 = vsel %vm878, %v864, 0
        %942 = vmatpush.bf16.xpose.msra.mxu0 0
        %943 = vmatpush.bf16.xpose.msra.mxu0 0
        %944 = vmatpush.bf16.xpose.msra.mxu0 0
        %945 = vmatpush.bf16.xpose.msra.mxu0 0
        %946 = vmatpush.bf16.xpose.msra.mxu0 0
        %947 = vmatpush.bf16.xpose.msra.mxu0 0
        %948 = vmatpush.bf16.xpose.msra.mxu0 0
        %949 = vmatpush.bf16.xpose.msra.mxu0 %v940
        %950 = vmatmul.bf16.gmra.mxu0 %v937
        %v951 = vpop.f32.mrf.mxu0
        %v952 = vadd.f32 0.0, %v951
        %v953 = vpop.f32.mrf.mxu0
        %954 = vdwg.mxu0
        %v956 = vsel %vm878, %v854, 0
        %v959 = vsel %vm878, %v865, 0
        %961 = vmatpush.bf16.xpose.msra.mxu0 0
        %962 = vmatpush.bf16.xpose.msra.mxu0 0
        %963 = vmatpush.bf16.xpose.msra.mxu0 0
        %964 = vmatpush.bf16.xpose.msra.mxu0 0
        %965 = vmatpush.bf16.xpose.msra.mxu0 0
        %966 = vmatpush.bf16.xpose.msra.mxu0 0
        %967 = vmatpush.bf16.xpose.msra.mxu0 0
        %968 = vmatpush.bf16.xpose.msra.mxu0 %v959
        %969 = vmatmul.bf16.gmra.mxu0 %v956
        %v970 = vpop.f32.mrf.mxu0
        %v971 = vadd.f32 0.0, %v970
        %v972 = vpop.f32.mrf.mxu0
        %973 = vdwg.mxu0
        %v975 = vsel %vm878, %v856, 0
        %v978 = vsel %vm878, %v866, 0
        %980 = vmatpush.bf16.xpose.msra.mxu0 0
        %981 = vmatpush.bf16.xpose.msra.mxu0 0
        %982 = vmatpush.bf16.xpose.msra.mxu0 0
        %983 = vmatpush.bf16.xpose.msra.mxu0 0
        %984 = vmatpush.bf16.xpose.msra.mxu0 0
        %985 = vmatpush.bf16.xpose.msra.mxu0 0
        %986 = vmatpush.bf16.xpose.msra.mxu0 0
        %987 = vmatpush.bf16.xpose.msra.mxu0 %v978
        %988 = vmatmul.bf16.gmra.mxu0 %v975
        %v989 = vpop.f32.mrf.mxu0
        %v990 = vadd.f32 0.0, %v989
        %v991 = vpop.f32.mrf.mxu0
        %992 = vdwg.mxu0
        %v994 = vsel %vm878, %v858, 0
        %v997 = vsel %vm878, %v867, 0
        %999 = vmatpush.bf16.xpose.msra.mxu0 0
        %1000 = vmatpush.bf16.xpose.msra.mxu0 0
        %1001 = vmatpush.bf16.xpose.msra.mxu0 0
        %1002 = vmatpush.bf16.xpose.msra.mxu0 0
        %1003 = vmatpush.bf16.xpose.msra.mxu0 0
        %1004 = vmatpush.bf16.xpose.msra.mxu0 0
        %1005 = vmatpush.bf16.xpose.msra.mxu0 0
        %1006 = vmatpush.bf16.xpose.msra.mxu0 %v997
        %1007 = vmatmul.bf16.gmra.mxu0 %v994
        %v1008 = vpop.f32.mrf.mxu0
        %v1009 = vadd.f32 0.0, %v1008
        %v1010 = vpop.f32.mrf.mxu0
        %1011 = vdwg.mxu0
        %v1013 = vsel %vm878, %v860, 0
        %v1016 = vsel %vm878, %v868, 0
        %1018 = vmatpush.bf16.xpose.msra.mxu0 0
        %1019 = vmatpush.bf16.xpose.msra.mxu0 0
        %1020 = vmatpush.bf16.xpose.msra.mxu0 0
        %1021 = vmatpush.bf16.xpose.msra.mxu0 0
        %1022 = vmatpush.bf16.xpose.msra.mxu0 0
        %1023 = vmatpush.bf16.xpose.msra.mxu0 0
        %1024 = vmatpush.bf16.xpose.msra.mxu0 0
        %1025 = vmatpush.bf16.xpose.msra.mxu0 %v1016
        %1026 = vmatmul.bf16.gmra.mxu0 %v1013
        %v1027 = vpop.f32.mrf.mxu0
        %v1028 = vadd.f32 0.0, %v1027
        %v1029 = vpop.f32.mrf.mxu0
        %1030 = vdwg.mxu0
        %vm1031 = vnez %v877
        %v1032 = vsel %vm1031, 16843009, 0
        %v1033 = vunpack.c.0.s8 %v1032
        %vm1034 = vcmp.ne.s32.totalorder %v1033, 0
        %v1035 = vsel %vm1034, 1, 0
        %vm1036 = vcmp.eq.s32.totalorder %v1035, 1
        %v1037 = vsel %vm1036, %v895, -1e+30
        %v1038 = vsel %vm1036, %v914, -1e+30
        %v1039 = vsel %vm1036, %v933, -1e+30
        %v1040 = vsel %vm1036, %v952, -1e+30
        %v1041 = vsel %vm1036, %v971, -1e+30
        %v1042 = vsel %vm1036, %v990, -1e+30
        %v1043 = vsel %vm1036, %v1009, -1e+30
        %v1044 = vsel %vm1036, %v1028, -1e+30
        %vm1045 = vcmask 64512
        %v1046 = vsel %vm1045, %v1037, -inf
        %1047 = vmax.xlane.f32.xlu0 %v1046
        %v1048 = vpop.xlane.xlu0 %1047
        %v1049 = vsel %vm1045, %v1038, -inf
        %1050 = vmax.xlane.f32.xlu0 %v1049
        %v1051 = vpop.xlane.xlu0 %1050
        %v1052 = vsel %vm1045, %v1039, -inf
        %1053 = vmax.xlane.f32.xlu0 %v1052
        %v1054 = vpop.xlane.xlu0 %1053
        %v1055 = vsel %vm1045, %v1040, -inf
        %1056 = vmax.xlane.f32.xlu0 %v1055
        %v1057 = vpop.xlane.xlu0 %1056
        %v1058 = vsel %vm1045, %v1041, -inf
        %1059 = vmax.xlane.f32.xlu0 %v1058
        %v1060 = vpop.xlane.xlu0 %1059
        %v1061 = vsel %vm1045, %v1042, -inf
        %1062 = vmax.xlane.f32.xlu0 %v1061
        %v1063 = vpop.xlane.xlu0 %1062
        %v1064 = vsel %vm1045, %v1043, -inf
        %1065 = vmax.xlane.f32.xlu0 %v1064
        %v1066 = vpop.xlane.xlu0 %1065
        %v1067 = vsel %vm1045, %v1044, -inf
        %1068 = vmax.xlane.f32.xlu0 %v1067
        %v1069 = vpop.xlane.xlu0 %1068
        %v1070 = vsub.f32 -inf, %v1048
        %v1071 = vsub.f32 -inf, %v1051
        %v1072 = vsub.f32 -inf, %v1054
        %v1073 = vsub.f32 -inf, %v1057
        %v1074 = vsub.f32 -inf, %v1060
        %v1075 = vsub.f32 -inf, %v1063
        %v1076 = vsub.f32 -inf, %v1066
        %v1077 = vsub.f32 -inf, %v1069
        %v1078 = vmul.f32 %v1070, 1.442695
        %v1079 = vpow.pop %v1078
        %v1080 = vmul.f32 %v1071, 1.442695
        %v1081 = vpow.pop %v1080
        %v1082 = vmul.f32 %v1072, 1.442695
        %v1083 = vpow.pop %v1082
        %v1084 = vmul.f32 %v1073, 1.442695
        %v1085 = vpow.pop %v1084
        %v1086 = vmul.f32 %v1074, 1.442695
        %v1087 = vpow.pop %v1086
        %v1088 = vmul.f32 %v1075, 1.442695
        %v1089 = vpow.pop %v1088
        %v1090 = vmul.f32 %v1076, 1.442695
        %v1091 = vpow.pop %v1090
        %v1092 = vmul.f32 %v1077, 1.442695
        %v1093 = vpow.pop %v1092
        %v1094 = vsub.f32 %v1037, %v1048
        %v1095 = vsub.f32 %v1038, %v1051
        %v1096 = vsub.f32 %v1039, %v1054
        %v1097 = vsub.f32 %v1040, %v1057
        %v1098 = vsub.f32 %v1041, %v1060
        %v1099 = vsub.f32 %v1042, %v1063
        %v1100 = vsub.f32 %v1043, %v1066
        %v1101 = vsub.f32 %v1044, %v1069
        %v1102 = vmul.f32 %v1094, 1.442695
        %v1103 = vpow.pop %v1102
        %v1104 = vmul.f32 %v1095, 1.442695
        %v1105 = vpow.pop %v1104
        %v1106 = vmul.f32 %v1096, 1.442695
        %v1107 = vpow.pop %v1106
        %v1108 = vmul.f32 %v1097, 1.442695
        %v1109 = vpow.pop %v1108
        %v1110 = vmul.f32 %v1098, 1.442695
        %v1111 = vpow.pop %v1110
        %v1112 = vmul.f32 %v1099, 1.442695
        %v1113 = vpow.pop %v1112
        %v1114 = vmul.f32 %v1100, 1.442695
        %v1115 = vpow.pop %v1114
        %v1116 = vmul.f32 %v1101, 1.442695
        %v1117 = vpow.pop %v1116
        %v1118 = vmul.f32 %v1079, 0.0
        %v1119 = vmul.f32 %v1081, 0.0
        %v1120 = vmul.f32 %v1083, 0.0
        %v1121 = vmul.f32 %v1085, 0.0
        %v1122 = vmul.f32 %v1087, 0.0
        %v1123 = vmul.f32 %v1089, 0.0
        %v1124 = vmul.f32 %v1091, 0.0
        %v1125 = vmul.f32 %v1093, 0.0
        %v1126 = vsel %vm1045, %v1103, 0.0
        %1127 = vadd.xlane.f32.xlu0 %v1126
        %v1128 = vpop.xlane.xlu0 %1127
        %v1129 = vsel %vm1045, %v1105, 0.0
        %1130 = vadd.xlane.f32.xlu0 %v1129
        %v1131 = vpop.xlane.xlu0 %1130
        %v1132 = vsel %vm1045, %v1107, 0.0
        %1133 = vadd.xlane.f32.xlu0 %v1132
        %v1134 = vpop.xlane.xlu0 %1133
        %v1135 = vsel %vm1045, %v1109, 0.0
        %1136 = vadd.xlane.f32.xlu0 %v1135
        %v1137 = vpop.xlane.xlu0 %1136
        %v1138 = vsel %vm1045, %v1111, 0.0
        %1139 = vadd.xlane.f32.xlu0 %v1138
        %v1140 = vpop.xlane.xlu0 %1139
        %v1141 = vsel %vm1045, %v1113, 0.0
        %1142 = vadd.xlane.f32.xlu0 %v1141
        %v1143 = vpop.xlane.xlu0 %1142
        %v1144 = vsel %vm1045, %v1115, 0.0
        %1145 = vadd.xlane.f32.xlu0 %v1144
        %v1146 = vpop.xlane.xlu0 %1145
        %v1147 = vsel %vm1045, %v1117, 0.0
        %1148 = vadd.xlane.f32.xlu0 %v1147
        %v1149 = vpop.xlane.xlu0 %1148
        %v1150 = vadd.f32 %v1118, %v1128
        %v1151 = vadd.f32 %v1119, %v1131
        %v1152 = vadd.f32 %v1120, %v1134
        %v1153 = vadd.f32 %v1121, %v1137
        %v1154 = vadd.f32 %v1122, %v1140
        %v1155 = vadd.f32 %v1123, %v1143
        %v1156 = vadd.f32 %v1124, %v1146
        %v1157 = vadd.f32 %v1125, %v1149
        %v1158 = vpack.c.bf16 %v1103, %v1103
        %v1159 = vpack.c.bf16 %v1105, %v1105
        %v1160 = vpack.c.bf16 %v1107, %v1107
        %v1161 = vpack.c.bf16 %v1109, %v1109
        %v1162 = vpack.c.bf16 %v1111, %v1111
        %v1163 = vpack.c.bf16 %v1113, %v1113
        %v1164 = vpack.c.bf16 %v1115, %v1115
        %v1165 = vpack.c.bf16 %v1117, %v1117
        %v1167 = vsel %vm1045, %v1158, 0
        %vm1169 = vcmask 1043456
        %v1171 = vsel %vm1169, %v869, 0
        %1173 = vmatpush.bf16.msra.mxu0 0
        %1174 = vmatpush.bf16.msra.mxu0 0
        %1175 = vmatpush.bf16.msra.mxu0 0
        %1176 = vmatpush.bf16.msra.mxu0 0
        %1177 = vmatpush.bf16.msra.mxu0 0
        %1178 = vmatpush.bf16.msra.mxu0 0
        %1179 = vmatpush.bf16.msra.mxu0 0
        %1180 = vmatpush.bf16.msra.mxu0 %v1171
        %1181 = vmatmul.bf16.gmra.mxu0 %v1167
        %v1182 = vpop.f32.mrf.mxu0
        %v1183 = vadd.f32 0.0, %v1182
        %v1184 = vpop.f32.mrf.mxu0
        %1185 = vdwg.mxu0
        %v1187 = vsel %vm1045, %v1159, 0
        %v1190 = vsel %vm1169, %v870, 0
        %1192 = vmatpush.bf16.msra.mxu0 0
        %1193 = vmatpush.bf16.msra.mxu0 0
        %1194 = vmatpush.bf16.msra.mxu0 0
        %1195 = vmatpush.bf16.msra.mxu0 0
        %1196 = vmatpush.bf16.msra.mxu0 0
        %1197 = vmatpush.bf16.msra.mxu0 0
        %1198 = vmatpush.bf16.msra.mxu0 0
        %1199 = vmatpush.bf16.msra.mxu0 %v1190
        %1200 = vmatmul.bf16.gmra.mxu0 %v1187
        %v1201 = vpop.f32.mrf.mxu0
        %v1202 = vadd.f32 0.0, %v1201
        %v1203 = vpop.f32.mrf.mxu0
        %1204 = vdwg.mxu0
        %v1206 = vsel %vm1045, %v1160, 0
        %v1209 = vsel %vm1169, %v871, 0
        %1211 = vmatpush.bf16.msra.mxu0 0
        %1212 = vmatpush.bf16.msra.mxu0 0
        %1213 = vmatpush.bf16.msra.mxu0 0
        %1214 = vmatpush.bf16.msra.mxu0 0
        %1215 = vmatpush.bf16.msra.mxu0 0
        %1216 = vmatpush.bf16.msra.mxu0 0
        %1217 = vmatpush.bf16.msra.mxu0 0
        %1218 = vmatpush.bf16.msra.mxu0 %v1209
        %1219 = vmatmul.bf16.gmra.mxu0 %v1206
        %v1220 = vpop.f32.mrf.mxu0
        %v1221 = vadd.f32 0.0, %v1220
        %v1222 = vpop.f32.mrf.mxu0
        %1223 = vdwg.mxu0
        %v1225 = vsel %vm1045, %v1161, 0
        %v1228 = vsel %vm1169, %v872, 0
        %1230 = vmatpush.bf16.msra.mxu0 0
        %1231 = vmatpush.bf16.msra.mxu0 0
        %1232 = vmatpush.bf16.msra.mxu0 0
        %1233 = vmatpush.bf16.msra.mxu0 0
        %1234 = vmatpush.bf16.msra.mxu0 0
        %1235 = vmatpush.bf16.msra.mxu0 0
        %1236 = vmatpush.bf16.msra.mxu0 0
        %1237 = vmatpush.bf16.msra.mxu0 %v1228
        %1238 = vmatmul.bf16.gmra.mxu0 %v1225
        %v1239 = vpop.f32.mrf.mxu0
        %v1240 = vadd.f32 0.0, %v1239
        %v1241 = vpop.f32.mrf.mxu0
        %1242 = vdwg.mxu0
        %v1244 = vsel %vm1045, %v1162, 0
        %v1247 = vsel %vm1169, %v873, 0
        %1249 = vmatpush.bf16.msra.mxu0 0
        %1250 = vmatpush.bf16.msra.mxu0 0
        %1251 = vmatpush.bf16.msra.mxu0 0
        %1252 = vmatpush.bf16.msra.mxu0 0
        %1253 = vmatpush.bf16.msra.mxu0 0
        %1254 = vmatpush.bf16.msra.mxu0 0
        %1255 = vmatpush.bf16.msra.mxu0 0
        %1256 = vmatpush.bf16.msra.mxu0 %v1247
        %1257 = vmatmul.bf16.gmra.mxu0 %v1244
        %v1258 = vpop.f32.mrf.mxu0
        %v1259 = vadd.f32 0.0, %v1258
        %v1260 = vpop.f32.mrf.mxu0
        %1261 = vdwg.mxu0
        %v1263 = vsel %vm1045, %v1163, 0
        %v1266 = vsel %vm1169, %v874, 0
        %1268 = vmatpush.bf16.msra.mxu0 0
        %1269 = vmatpush.bf16.msra.mxu0 0
        %1270 = vmatpush.bf16.msra.mxu0 0
        %1271 = vmatpush.bf16.msra.mxu0 0
        %1272 = vmatpush.bf16.msra.mxu0 0
        %1273 = vmatpush.bf16.msra.mxu0 0
        %1274 = vmatpush.bf16.msra.mxu0 0
        %1275 = vmatpush.bf16.msra.mxu0 %v1266
        %1276 = vmatmul.bf16.gmra.mxu0 %v1263
        %v1277 = vpop.f32.mrf.mxu0
        %v1278 = vadd.f32 0.0, %v1277
        %v1279 = vpop.f32.mrf.mxu0
        %1280 = vdwg.mxu0
        %v1282 = vsel %vm1045, %v1164, 0
        %v1285 = vsel %vm1169, %v875, 0
        %1287 = vmatpush.bf16.msra.mxu0 0
        %1288 = vmatpush.bf16.msra.mxu0 0
        %1289 = vmatpush.bf16.msra.mxu0 0
        %1290 = vmatpush.bf16.msra.mxu0 0
        %1291 = vmatpush.bf16.msra.mxu0 0
        %1292 = vmatpush.bf16.msra.mxu0 0
        %1293 = vmatpush.bf16.msra.mxu0 0
        %1294 = vmatpush.bf16.msra.mxu0 %v1285
        %1295 = vmatmul.bf16.gmra.mxu0 %v1282
        %v1296 = vpop.f32.mrf.mxu0
        %v1297 = vadd.f32 0.0, %v1296
        %v1298 = vpop.f32.mrf.mxu0
        %1299 = vdwg.mxu0
        %v1301 = vsel %vm1045, %v1165, 0
        %v1304 = vsel %vm1169, %v876, 0
        %1306 = vmatpush.bf16.msra.mxu0 0
        %1307 = vmatpush.bf16.msra.mxu0 0
        %1308 = vmatpush.bf16.msra.mxu0 0
        %1309 = vmatpush.bf16.msra.mxu0 0
        %1310 = vmatpush.bf16.msra.mxu0 0
        %1311 = vmatpush.bf16.msra.mxu0 0
        %1312 = vmatpush.bf16.msra.mxu0 0
        %1313 = vmatpush.bf16.msra.mxu0 %v1304
        %1314 = vmatmul.bf16.gmra.mxu0 %v1301
        %v1315 = vpop.f32.mrf.mxu0
        %v1316 = vadd.f32 0.0, %v1315
        %v1317 = vpop.f32.mrf.mxu0
        %1318 = vdwg.mxu0
        %v1319 = vadd.f32 %v1118, %v1183
        %v1320 = vadd.f32 %v1119, %v1202
        %v1321 = vadd.f32 %v1120, %v1221
        %v1322 = vadd.f32 %v1121, %v1240
        %v1323 = vadd.f32 %v1122, %v1259
        %v1324 = vadd.f32 %v1123, %v1278
        %v1325 = vadd.f32 %v1124, %v1297
        %v1326 = vadd.f32 %v1125, %v1316
        %v1327 = vmax.f32 %v1150, 1e-30
        %v1328 = vmax.f32 %v1151, 1e-30
        %v1329 = vmax.f32 %v1152, 1e-30
        %v1330 = vmax.f32 %v1153, 1e-30
        %v1331 = vmax.f32 %v1154, 1e-30
        %v1332 = vmax.f32 %v1155, 1e-30
        %v1333 = vmax.f32 %v1156, 1e-30
        %v1334 = vmax.f32 %v1157, 1e-30
        %v1335 = vrcp.pop %v1327
        %v1336 = vrcp.pop %v1328
        %v1337 = vrcp.pop %v1329
        %v1338 = vrcp.pop %v1330
        %v1339 = vrcp.pop %v1331
        %v1340 = vrcp.pop %v1332
        %v1341 = vrcp.pop %v1333
        %v1342 = vrcp.pop %v1334
        %v1343 = vmul.f32 %v1319, %v1335
        %v1344 = vmul.f32 %v1320, %v1336
        %v1345 = vmul.f32 %v1321, %v1337
        %v1346 = vmul.f32 %v1322, %v1338
        %v1347 = vmul.f32 %v1323, %v1339
        %v1348 = vmul.f32 %v1324, %v1340
        %v1349 = vmul.f32 %v1325, %v1341
        %v1350 = vmul.f32 %v1326, %v1342
        %v1351 = vpack.c.bf16 %v1343, %v1343
        %v1352 = vld [vmem:[#allocation9] sm:$0x3]
        %v1353 = vpack.c.bf16 %v1344, %v1344
        %s1354 = scalar_lea.vmem [#allocation9], 2
        %v1355 = vld [vmem:[%s1354] sm:$0x3]
        %v1357 = vsel %vm878, %v1353, 0
        %vm1359 = vcmask 1041408
        %v1361 = vsel %vm1359, %v1355, 0
        %1363 = vmatpush.bf16.msra.mxu0 0
        %1364 = vmatpush.bf16.msra.mxu0 0
        %1365 = vmatpush.bf16.msra.mxu0 0
        %1366 = vmatpush.bf16.msra.mxu0 0
        %1367 = vmatpush.bf16.msra.mxu0 0
        %1368 = vmatpush.bf16.msra.mxu0 0
        %1369 = vmatpush.bf16.msra.mxu0 0
        %1370 = vmatpush.bf16.msra.mxu0 %v1361
        %1371 = vmatmul.bf16.gmra.mxu0 %v1357
        %v1372 = vpop.f32.mrf.mxu0
        %v1373 = vadd.f32 0.0, %v1372
        %v1374 = vpop.f32.mrf.mxu0
        %1375 = vdwg.mxu0
        %v1377 = vsel %vm878, %v1351, 0
        %v1380 = vsel %vm1359, %v1352, 0
        %1382 = vmatpush.bf16.msra.mxu0 0
        %1383 = vmatpush.bf16.msra.mxu0 0
        %1384 = vmatpush.bf16.msra.mxu0 0
        %1385 = vmatpush.bf16.msra.mxu0 0
        %1386 = vmatpush.bf16.msra.mxu0 0
        %1387 = vmatpush.bf16.msra.mxu0 0
        %1388 = vmatpush.bf16.msra.mxu0 0
        %1389 = vmatpush.bf16.msra.mxu0 %v1380
        %1390 = vmatmul.bf16.gmra.mxu0 %v1377
        %v1391 = vpop.f32.mrf.mxu0
        %v1392 = vadd.f32 %v1373, %v1391
        %v1393 = vpop.f32.mrf.mxu0
        %1394 = vdwg.mxu0
        %v1395 = vpack.c.bf16 %v1345, %v1345
        %s1396 = scalar_lea.vmem [#allocation9], 4
        %v1397 = vld [vmem:[%s1396] sm:$0x3]
        %v1399 = vsel %vm878, %v1395, 0
        %v1402 = vsel %vm1359, %v1397, 0
        %1404 = vmatpush.bf16.msra.mxu0 0
        %1405 = vmatpush.bf16.msra.mxu0 0
        %1406 = vmatpush.bf16.msra.mxu0 0
        %1407 = vmatpush.bf16.msra.mxu0 0
        %1408 = vmatpush.bf16.msra.mxu0 0
        %1409 = vmatpush.bf16.msra.mxu0 0
        %1410 = vmatpush.bf16.msra.mxu0 0
        %1411 = vmatpush.bf16.msra.mxu0 %v1402
        %1412 = vmatmul.bf16.gmra.mxu0 %v1399
        %v1413 = vpop.f32.mrf.mxu0
        %v1414 = vadd.f32 0.0, %v1413
        %v1415 = vpop.f32.mrf.mxu0
        %1416 = vdwg.mxu0
        %v1417 = vadd.f32 %v1392, %v1414
        %v1418 = vpack.c.bf16 %v1346, %v1346
        %s1419 = scalar_lea.vmem [#allocation9], 6
        %v1420 = vld [vmem:[%s1419] sm:$0x3]
        %v1422 = vsel %vm878, %v1418, 0
        %v1425 = vsel %vm1359, %v1420, 0
        %1427 = vmatpush.bf16.msra.mxu0 0
        %1428 = vmatpush.bf16.msra.mxu0 0
        %1429 = vmatpush.bf16.msra.mxu0 0
        %1430 = vmatpush.bf16.msra.mxu0 0
        %1431 = vmatpush.bf16.msra.mxu0 0
        %1432 = vmatpush.bf16.msra.mxu0 0
        %1433 = vmatpush.bf16.msra.mxu0 0
        %1434 = vmatpush.bf16.msra.mxu0 %v1425
        %1435 = vmatmul.bf16.gmra.mxu0 %v1422
        %v1436 = vpop.f32.mrf.mxu0
        %v1437 = vadd.f32 0.0, %v1436
        %v1438 = vpop.f32.mrf.mxu0
        %1439 = vdwg.mxu0
        %v1440 = vadd.f32 %v1417, %v1437
        %v1441 = vpack.c.bf16 %v1347, %v1347
        %s1442 = scalar_lea.vmem [#allocation9], 8
        %v1443 = vld [vmem:[%s1442] sm:$0x3]
        %v1445 = vsel %vm878, %v1441, 0
        %v1448 = vsel %vm1359, %v1443, 0
        %1450 = vmatpush.bf16.msra.mxu0 0
        %1451 = vmatpush.bf16.msra.mxu0 0
        %1452 = vmatpush.bf16.msra.mxu0 0
        %1453 = vmatpush.bf16.msra.mxu0 0
        %1454 = vmatpush.bf16.msra.mxu0 0
        %1455 = vmatpush.bf16.msra.mxu0 0
        %1456 = vmatpush.bf16.msra.mxu0 0
        %1457 = vmatpush.bf16.msra.mxu0 %v1448
        %1458 = vmatmul.bf16.gmra.mxu0 %v1445
        %v1459 = vpop.f32.mrf.mxu0
        %v1460 = vadd.f32 0.0, %v1459
        %v1461 = vpop.f32.mrf.mxu0
        %1462 = vdwg.mxu0
        %v1463 = vadd.f32 %v1440, %v1460
        %v1464 = vpack.c.bf16 %v1348, %v1348
        %s1465 = scalar_lea.vmem [#allocation9], 10
        %v1466 = vld [vmem:[%s1465] sm:$0x3]
        %v1468 = vsel %vm878, %v1464, 0
        %v1471 = vsel %vm1359, %v1466, 0
        %1473 = vmatpush.bf16.msra.mxu0 0
        %1474 = vmatpush.bf16.msra.mxu0 0
        %1475 = vmatpush.bf16.msra.mxu0 0
        %1476 = vmatpush.bf16.msra.mxu0 0
        %1477 = vmatpush.bf16.msra.mxu0 0
        %1478 = vmatpush.bf16.msra.mxu0 0
        %1479 = vmatpush.bf16.msra.mxu0 0
        %1480 = vmatpush.bf16.msra.mxu0 %v1471
        %1481 = vmatmul.bf16.gmra.mxu0 %v1468
        %v1482 = vpop.f32.mrf.mxu0
        %v1483 = vadd.f32 0.0, %v1482
        %v1484 = vpop.f32.mrf.mxu0
        %1485 = vdwg.mxu0
        %v1486 = vadd.f32 %v1463, %v1483
        %v1487 = vpack.c.bf16 %v1349, %v1349
        %s1488 = scalar_lea.vmem [#allocation9], 12
        %v1489 = vld [vmem:[%s1488] sm:$0x3]
        %v1491 = vsel %vm878, %v1487, 0
        %v1494 = vsel %vm1359, %v1489, 0
        %1496 = vmatpush.bf16.msra.mxu0 0
        %1497 = vmatpush.bf16.msra.mxu0 0
        %1498 = vmatpush.bf16.msra.mxu0 0
        %1499 = vmatpush.bf16.msra.mxu0 0
        %1500 = vmatpush.bf16.msra.mxu0 0
        %1501 = vmatpush.bf16.msra.mxu0 0
        %1502 = vmatpush.bf16.msra.mxu0 0
        %1503 = vmatpush.bf16.msra.mxu0 %v1494
        %1504 = vmatmul.bf16.gmra.mxu0 %v1491
        %v1505 = vpop.f32.mrf.mxu0
        %v1506 = vadd.f32 0.0, %v1505
        %v1507 = vpop.f32.mrf.mxu0
        %1508 = vdwg.mxu0
        %v1509 = vadd.f32 %v1486, %v1506
        %v1510 = vpack.c.bf16 %v1350, %v1350
        %s1511 = scalar_lea.vmem [#allocation9], 14
        %v1512 = vld [vmem:[%s1511] sm:$0x3]
        %v1514 = vsel %vm878, %v1510, 0
        %v1517 = vsel %vm1359, %v1512, 0
        %1519 = vmatpush.bf16.msra.mxu0 0
        %1520 = vmatpush.bf16.msra.mxu0 0
        %1521 = vmatpush.bf16.msra.mxu0 0
        %1522 = vmatpush.bf16.msra.mxu0 0
        %1523 = vmatpush.bf16.msra.mxu0 0
        %1524 = vmatpush.bf16.msra.mxu0 0
        %1525 = vmatpush.bf16.msra.mxu0 0
        %1526 = vmatpush.bf16.msra.mxu0 %v1517
        %1527 = vmatmul.bf16.gmra.mxu0 %v1514
        %v1528 = vpop.f32.mrf.mxu0
        %v1529 = vadd.f32 0.0, %v1528
        %v1530 = vpop.f32.mrf.mxu0
        %1531 = vdwg.mxu0
        %v1532 = vadd.f32 %v1509, %v1529
        %v1533 = vld [vmem:[%s8] sm:$0x1]
        %v1535 = vperm.slane %v1533, 0
        %v1537 = vadd.f32 %v1532, %v1535
        %v1538 = vadd.f32 %v686, %v1537
        %v1539 = vld [vmem:[%s9] sm:$0x1]
        %v1540 = vld [vmem:[%s10] sm:$0x1]
        %v1541 = vsel %vm828, %v1538, 0.0
        %1542 = vadd.xlane.f32.xlu0 %v1541
        %v1543 = vpop.xlane.xlu0 %1542
        %v1544 = vrcp.pop 32.0
        %v1545 = vmul.f32 32.0, %v1544
        %v1546 = vsub.f32 1.0, %v1545
        %v1547 = vmul.f32 %v1544, %v1546
        %v1548 = vadd.f32 %v1544, %v1547
        %vm1549 = vweird.f32 %v1544
        %v1550 = vsel %vm1549, %v1544, %v1548
        %v1551 = vmul.f32 %v1543, %v1550
        %v1552 = vsub.f32 %v1538, %v1551
        %v1553 = vmul.f32 %v1552, %v1552
        %v1554 = vsel %vm828, %v1553, 0.0
        %1555 = vadd.xlane.f32.xlu0 %v1554
        %v1556 = vpop.xlane.xlu0 %1555
        %v1557 = vmul.f32 %v1556, %v1550
        %v1558 = vadd.f32 %v1557, 1e-05
        %v1559 = vrsqrt.pop %v1558
        %v1560 = vmul.f32 %v1559, %v1558
        %v1561 = vmul.f32 %v1560, %v1559
        %v1562 = vmul.f32 0.5, %v1561
        %v1563 = vsub.f32 1.5, %v1562
        %v1564 = vmul.f32 %v1559, %v1563
        %vm1565 = vweird.f32 %v1558
        %vm1566 = vweird.f32 %v1559
        %vm1567 = vmor %vm1565, %vm1566
        %v1568 = vsel %vm1567, %v1559, %v1564
        %v1569 = vmul.f32 %v1552, %v1568
        %v1571 = vperm.slane %v1539, 0
        %v1573 = vmul.f32 %v1569, %v1571
        %v1575 = vperm.slane %v1540, 0
        %v1577 = vadd.f32 %v1573, %v1575
        %v1578 = vpack.c.bf16 %v1577, %v1577
        %v1579 = vld [vmem:[#allocation10] sm:$0xf]
        %v1580 = vld [vmem:[#allocation10 + $0x4] sm:$0xf]
        %v1581 = vld [vmem:[#allocation10 + $0x8] sm:$0xf]
        %v1582 = vld [vmem:[#allocation10 + $0xc] sm:$0xf]
        %v1583 = vld [vmem:[%s12] sm:$0x1]
        %v1585 = vperm.slane %v1583, 0
        %v1591 = vunpack.c.l.b16 %v1579
        %v1592 = vunpack.c.l.b16 %v1580
        %v1593 = vunpack.c.l.b16 %v1581
        %v1594 = vunpack.c.l.b16 %v1582
        %v1595 = vpack.c.b16 %v1592, %v1591
        %v1596 = vpack.c.b16 %v1594, %v1593
        %v1600 = vsel %vm828, %v1578, 0
        %1602 = vmatpush.bf16.msra.mxu0 0
        %1603 = vmatpush.bf16.msra.mxu0 0
        %1604 = vmatpush.bf16.msra.mxu0 0
        %1605 = vmatpush.bf16.msra.mxu0 0
        %1606 = vmatpush.bf16.msra.mxu0 0
        %1607 = vmatpush.bf16.msra.mxu0 0
        %1608 = vmatpush.bf16.msra.mxu0 %v1596
        %1609 = vmatpush.bf16.msra.mxu0 %v1595
        %1610 = vmatmul.bf16.gmra.mxu0 %v1600
        %v1611 = vpop.f32.mrf.mxu0
        %v1612 = vadd.f32 %v1585, %v1611
        %v1613 = vpop.f32.mrf.mxu0
        %1614 = vdwg.mxu0
        %v1615 = vmax.f32 %v1612, 0.0
        %v1616 = vpack.c.bf16 %v1615, %v1615
        %v1617 = vld [vmem:[%s13] sm:$0xf]
        %v1618 = vld [vmem:[%s13 + $0x4] sm:$0xf]
        %v1619 = vld [vmem:[%s13 + $0x8] sm:$0xf]
        %v1620 = vld [vmem:[%s13 + $0xc] sm:$0xf]
        %v1621 = vld [vmem:[%s13 + $0x10] sm:$0xf]
        %v1622 = vld [vmem:[%s13 + $0x14] sm:$0xf]
        %v1623 = vld [vmem:[%s13 + $0x18] sm:$0xf]
        %v1624 = vld [vmem:[%s13 + $0x1c] sm:$0xf]
        %v1625 = vld [vmem:[%s14] sm:$0x1]
        %v1627 = vperm.slane %v1625, 0
        %v1637 = vunpack.c.l.b16 %v1617
        %v1638 = vunpack.c.l.b16 %v1618
        %v1639 = vunpack.c.l.b16 %v1619
        %v1640 = vunpack.c.l.b16 %v1620
        %v1641 = vunpack.c.l.b16 %v1621
        %v1642 = vunpack.c.l.b16 %v1622
        %v1643 = vunpack.c.l.b16 %v1623
        %v1644 = vunpack.c.l.b16 %v1624
        %v1645 = vpack.c.b16 %v1638, %v1637
        %v1646 = vpack.c.b16 %v1640, %v1639
        %v1647 = vpack.c.b16 %v1642, %v1641
        %v1648 = vpack.c.b16 %v1644, %v1643
        %vm1653 = vcmask 523264
        %v1655 = vsel %vm1653, %v1616, 0
        %1657 = vmatpush.bf16.msra.mxu0 0
        %1658 = vmatpush.bf16.msra.mxu0 0
        %1659 = vmatpush.bf16.msra.mxu0 0
        %1660 = vmatpush.bf16.msra.mxu0 0
        %1661 = vmatpush.bf16.msra.mxu0 %v1648
        %1662 = vmatpush.bf16.msra.mxu0 %v1647
        %1663 = vmatpush.bf16.msra.mxu0 %v1646
        %1664 = vmatpush.bf16.msra.mxu0 %v1645
        %1665 = vmatmul.bf16.gmra.mxu0 %v1655
        %v1666 = vpop.f32.mrf.mxu0
        %v1667 = vadd.f32 %v1627, %v1666
        %v1668 = vpop.f32.mrf.mxu0
        %1669 = vdwg.mxu0
        %v1670 = vadd.f32 %v1577, %v1667
        %v1671 = vld [vmem:[%s15] sm:$0x1]
        %v1672 = vld [vmem:[%s16] sm:$0x1]
        %v1673 = vsel %vm828, %v1670, 0.0
        %1674 = vadd.xlane.f32.xlu0 %v1673
        %v1675 = vpop.xlane.xlu0 %1674
        %v1676 = vmul.f32 %v1675, %v1550
        %v1677 = vsub.f32 %v1670, %v1676
        %v1678 = vmul.f32 %v1677, %v1677
        %v1679 = vsel %vm828, %v1678, 0.0
        %1680 = vadd.xlane.f32.xlu0 %v1679
        %v1681 = vpop.xlane.xlu0 %1680
        %v1682 = vmul.f32 %v1681, %v1550
        %v1683 = vadd.f32 %v1682, 1e-05
        %v1684 = vrsqrt.pop %v1683
        %v1685 = vmul.f32 %v1684, %v1683
        %v1686 = vmul.f32 %v1685, %v1684
        %v1687 = vmul.f32 0.5, %v1686
        %v1688 = vsub.f32 1.5, %v1687
        %v1689 = vmul.f32 %v1684, %v1688
        %vm1690 = vweird.f32 %v1683
        %vm1691 = vweird.f32 %v1684
        %vm1692 = vmor %vm1690, %vm1691
        %v1693 = vsel %vm1692, %v1684, %v1689
        %v1694 = vmul.f32 %v1677, %v1693
        %v1696 = vperm.slane %v1671, 0
        %v1698 = vmul.f32 %v1694, %v1696
        %v1700 = vperm.slane %v1672, 0
        %v1702 = vadd.f32 %v1698, %v1700
        %1703 = vst.msk [vmem:[%s675] sm:$0xff] %vm828, %v1702
        %s1704 = sand.u32 %s436, 1
        %s1705 = scalar_lea.sflag [#allocation6], %s1704
        %s1706 = sand.u32 %s436, 1
        %s1707 = smul.addr %s1706, 8
        %s1708 = scalar_lea.vmem [#allocation12], %s1707
        // Predicated region
        $region109: #{tpu_custom_call.1} parent=87 // pred_check
          %p1709 = pneg %p446
        $region110: #{tpu_custom_call.1} parent=87 // pred_check_branch
          %1711 = sbr.rel (%p1709) target = $region112
        $region111: #{tpu_custom_call.1} parent=87 // pred_region
          %1713 = vsyncadd %s1705, 0
          %s1714 = sadd.s32 %s43, %s42
          %s1715 = smul.addr %s1714, 8
          %s1716 = scalar_lea.hbm %s17, %s1715
          %s1718 = sshll.u32 %s1708, 4
          %s1719 = int_to_ptr.vmem [resolvable:$true] %s1718
          %s1720 = sshll.u32 %s1716, 4
          %s1721 = int_to_ptr.hbm [resolvable:$true] %s1720
          %1723 = dma.vmem_to_hbm [thread:$0]  %s1719, 128, %s1721, %s1705
        $region112: #{tpu_custom_call.1} parent=87 // pred_fallthru
          _
      $region88: #{tpu_custom_call.1} parent=5 // pred_fallthru
        _
      %p1724 = scmp.le.s32.totalorder 2, %s33
      // Predicated region
      $region113: #{tpu_custom_call.1} parent=5 // pred_check
        %p1725 = pneg %p1724
      $region114: #{tpu_custom_call.1} parent=5 // pred_check_branch
        %1727 = sbr.rel (%p1725) target = $region116
      $region115: #{tpu_custom_call.1} parent=5 // pred_region
        %s1728 = ssub.s32 %s33, 2
        // Predicated region
        $region117: #{tpu_custom_call.1} parent=115 // pred_check
          %p1729 = pneg %p452
        $region118: #{tpu_custom_call.1} parent=115 // pred_check_branch
          %1731 = sbr.rel (%p1729) target = $region120
        $region119: #{tpu_custom_call.1} parent=115 // pred_region
          %s1732 = sand.u32 %s437, 1
          %s1733 = scalar_lea.sflag [#allocation6], %s1732
          %s1734 = sand.u32 %s437, 1
          %s1735 = smul.addr %s1734, 8
          %s1736 = scalar_lea.vmem [#allocation12], %s1735
          %1738 = dma.done %s1733, 128
        $region120: #{tpu_custom_call.1} parent=115 // pred_fallthru
          _
      $region116: #{tpu_custom_call.1} parent=5 // pred_fallthru
        _
    $region6: #{tpu_custom_call.1} parent=1 // loop_footer
      %s37 = sadd.s32 1, %s33
    $region7: #{tpu_custom_call.1} parent=1 // loop_footer_branch
      %32 = sbr.rel target = $region3
    $region8: #{tpu_custom_call.1} parent=1 // loop_exit
      _
    %1739 = vsyncpa [#allocation5], 1
    %s1740 = scalar_lea.sflag [#allocation5], 1
    %1741 = vsyncpa %s1740, 1
    %1742 = vsyncpa [#allocation8], 1
    %s1743 = scalar_lea.sflag [#allocation8], 1
    %1744 = vsyncpa %s1743, 1
    %1745 = vsyncpa [#allocation11], 1
    %1746 = vsyncpa [#allocation6], 1
    %s1747 = scalar_lea.sflag [#allocation6], 1
    %1748 = vsyncpa %s1747, 1

</llo_original>
